<compile_context>
chip_gen: v7x
topology: tpu7x:2x2x1
jax: 0.10.0
libtpu: 0.0.40
codegen_flags: <defaults>
</compile_context>

<pallas_src>
import functools
import numpy as np
import jax
import jax.numpy as jnp
from jax import lax
from jax.experimental import pallas as pl
from jax.experimental.pallas import tpu as pltpu

EPS = 1e-5


def _col_masks(H, W):
    """0/1 lane masks (2, H*W) zeroing column-wrap positions of the flattened
    image: row 0 is for the kx=0 tap (reads column w-1), row 1 for kx=2
    (reads column w+1)."""
    w = np.tile(np.arange(W), H)
    m = np.empty((2, H * W), np.float32)
    m[0] = (w >= 1).astype(np.float32)
    m[1] = (w <= W - 2).astype(np.float32)
    return jnp.asarray(m)


def _conv_bn_stats_kernel(pre_bn_relu, W, A, *refs):
    """3x3 conv (stride 1, pad 1) on one image in channel-major flattened
    layout (C, H*W), plus per-image BN partial stats of the conv output.

    If pre_bn_relu, the input is first mapped through y -> relu(y*scale+shift)
    (bn1+relu feeding conv2); zero padding is applied AFTER that transform
    (the pad bands of the scratch stay exact zeros), matching PyTorch."""
    if pre_bn_relu:
        x_ref, w_ref, mask_ref, sc_ref, sh_ref, y_ref, st_ref, xp_ref, z_ref = refs
    else:
        x_ref, w_ref, mask_ref, y_ref, st_ref, xp_ref, z_ref = refs

    Cin, HW = x_ref.shape
    pad_r = W + 1

    x = x_ref[...]
    if pre_bn_relu:
        x = jnp.maximum(x * sc_ref[...] + sh_ref[...], 0.0)   # (Cin,1) bcast over lanes

    # Lane-padded row buffer: [ zeros(A) | image(H*W) | zeros(W+1) ].
    xp_ref[:, pl.ds(0, A)] = jnp.zeros((Cin, A), jnp.float32)
    xp_ref[:, pl.ds(A + HW, pad_r)] = jnp.zeros((Cin, pad_r), jnp.float32)
    xp_ref[:, pl.ds(A, HW)] = x          # lane-aligned full-width store (A % 128 == 0)

    m_left = mask_ref[pl.ds(0, 1), :]    # (1, HW) column validity for kx = 0
    m_right = mask_ref[pl.ds(1, 1), :]   # (1, HW) column validity for kx = 2

    # im2col slab z (9*Cin, HW): row tap*Cin + ci holds channel ci shifted by
    # (ky-1, kx-1).  Row padding comes from the zero bands; column-wrap
    # positions of the kx != 1 taps are zeroed by the lane masks.
    for ky in range(3):
        for kx in range(3):
            tap = ky * 3 + kx
            start = A + (ky - 1) * W + (kx - 1)                # static offset
            slab = xp_ref[:, pl.ds(start, HW)]                 # (Cin, HW) shifted load
            if kx == 0:
                slab = slab * m_left
            elif kx == 2:
                slab = slab * m_right
            z_ref[pl.ds(tap * Cin, Cin), :] = slab

    # Single lane-dense GEMM: (Cout, 9*Cin) @ (9*Cin, HW) -> (Cout, HW).
    y = jnp.dot(w_ref[...], z_ref[...], preferred_element_type=jnp.float32)
    y_ref[...] = y

    # Fused per-image BN partial statistics (sum, sum of squares) over H*W.
    st_ref[:, 0:1] = jnp.sum(y, axis=1, keepdims=True)
    st_ref[:, 1:2] = jnp.sum(y * y, axis=1, keepdims=True)


def _bn_add_relu_kernel(y_ref, x_ref, sc_ref, sh_ref, o_ref):
    # relu(bn2(y) + identity), elementwise on the lane-dense (C, H*W) slab.
    o_ref[...] = jnp.maximum(y_ref[...] * sc_ref[...] + sh_ref[...] + x_ref[...], 0.0)


def _vmem_limit(per_step_bytes):
    # Explicit scoped-VMEM budget with headroom; 32-48 MiB is safe on every
    # generation (v5e/v6e 128 MiB physical, v7x 64 MiB physical).
    return int(min(max(4 * per_step_bytes + (4 << 20), 32 << 20), 48 << 20))


def _conv_bn_stats(x_flat, w_r, masks, W, scale=None, shift=None):
    N, Cin, HW = x_flat.shape
    Cout = w_r.shape[0]
    A = ((W + 1 + 127) // 128) * 128     # lane-aligned offset of the image in the pad buffer
    pre = scale is not None
    kernel = functools.partial(_conv_bn_stats_kernel, pre, W, A)

    in_specs = [pl.BlockSpec((None, Cin, HW), lambda n: (n, 0, 0)),
                pl.BlockSpec((Cout, 9 * Cin), lambda n: (0, 0)),
                pl.BlockSpec((2, HW), lambda n: (0, 0))]
    args = [x_flat, w_r, masks]
    if pre:
        in_specs += [pl.BlockSpec((Cin, 1), lambda n: (0, 0)),
                     pl.BlockSpec((Cin, 1), lambda n: (0, 0))]
        args += [scale, shift]

    per_step = 4 * (2 * Cin * HW + 2 * (Cout * HW + 2 * Cout)   # double-buffered I/O blocks
                    + 9 * Cin * Cout + 2 * HW                   # weights + masks
                    + Cin * (A + HW + W + 1) + 9 * Cin * HW)    # scratch buffers
    # TODO(synk): for large feature maps, add a row-tile grid axis over H*W
    # (with a +/-W halo) so block + scratch footprint stays bounded and small-N
    # batches still expose >=4 pipeline steps per TensorCore.

    return pl.pallas_call(
        kernel,
        grid=(N,),
        in_specs=in_specs,
        out_specs=(pl.BlockSpec((None, Cout, HW), lambda n: (n, 0, 0)),
                   pl.BlockSpec((None, Cout, 2), lambda n: (n, 0, 0))),
        out_shape=(jax.ShapeDtypeStruct((N, Cout, HW), jnp.float32),
                   jax.ShapeDtypeStruct((N, Cout, 2), jnp.float32)),
        scratch_shapes=[pltpu.VMEM((Cin, A + HW + W + 1), jnp.float32),
                        pltpu.VMEM((9 * Cin, HW), jnp.float32)],
        compiler_params=pltpu.CompilerParams(
            dimension_semantics=("parallel",),
            vmem_limit_bytes=_vmem_limit(per_step)),
    )(*args)


def _finalize_bn(stats, gamma, beta, count):
    """Tiny (C,)-sized training-BN finalisation from per-image [sum, sum_sq].
    Note: E[x^2]-E[x]^2 in f32; conv outputs are near zero-mean here so the
    cancellation is benign at this scale (a shifted/Welford form would be
    safer for very large N*H*W)."""
    s = jnp.sum(stats[:, :, 0], axis=0)
    ss = jnp.sum(stats[:, :, 1], axis=0)
    mu = s / count
    var = jnp.maximum(ss / count - mu * mu, 0.0)   # biased variance (training BN)
    scale = gamma.astype(jnp.float32) * lax.rsqrt(var + EPS)
    shift = beta.astype(jnp.float32) - mu * scale
    return scale.reshape(-1, 1), shift.reshape(-1, 1)   # (C, 1): broadcasts over lanes


def _bn_add_relu(y2, x_flat, scale, shift):
    N, C, HW = y2.shape
    per_step = 4 * (2 * 3 * C * HW + 2 * C)
    return pl.pallas_call(
        _bn_add_relu_kernel,
        grid=(N,),
        in_specs=[pl.BlockSpec((None, C, HW), lambda n: (n, 0, 0)),
                  pl.BlockSpec((None, C, HW), lambda n: (n, 0, 0)),
                  pl.BlockSpec((C, 1), lambda n: (0, 0)),
                  pl.BlockSpec((C, 1), lambda n: (0, 0))],
        out_specs=pl.BlockSpec((None, C, HW), lambda n: (n, 0, 0)),
        out_shape=jax.ShapeDtypeStruct((N, C, HW), jnp.float32),
        input_output_aliases={0: 0},      # write the result into y2's buffer
        compiler_params=pltpu.CompilerParams(
            dimension_semantics=("parallel",),
            vmem_limit_bytes=_vmem_limit(per_step)),
    )(y2, x_flat, scale, shift)


@jax.jit
def basic_block_forward(x_nchw, w1_oihw, g1, b1, w2_oihw, g2, b2):
    """BasicBlock forward with stride=1 and downsample=None (module defaults)."""
    # TODO(synk): stride > 1 and the optional `downsample` branch are not implemented.
    N, Cin, H, W = x_nchw.shape
    Cout = w1_oihw.shape[0]
    assert Cin == Cout, "identity path requires inplanes == planes when downsample is None"
    HW = H * W

    # Channel-major flattened layouts: plain reshapes of contiguous NCHW, so no
    # HBM transpose passes are needed anywhere.
    x_flat = x_nchw.reshape(N, Cin, HW).astype(jnp.float32)
    # OIHW -> (Cout, 9*Cin) with column order (ky, kx, ci), matching the im2col rows.
    w1r = jnp.transpose(w1_oihw.astype(jnp.float32), (0, 2, 3, 1)).reshape(Cout, 9 * Cin)
    w2r = jnp.transpose(w2_oihw.astype(jnp.float32), (0, 2, 3, 1)).reshape(Cout, 9 * Cout)
    masks = _col_masks(H, W)
    count = N * HW

    # conv1 + bn1 partial stats
    y1, st1 = _conv_bn_stats(x_flat, w1r, masks, W)
    sc1, sh1 = _finalize_bn(st1, g1, b1, count)

    # relu(bn1) applied in-kernel, then conv2 + bn2 partial stats
    y2, st2 = _conv_bn_stats(y1, w2r, masks, W, sc1, sh1)
    sc2, sh2 = _finalize_bn(st2, g2, b2, count)

    # bn2-apply + residual add + relu (aliased into y2's buffer)
    out = _bn_add_relu(y2, x_flat, sc2, sh2)
    return out.reshape(N, Cout, H, W)            # already NCHW; reshape is free


def basic_block_reference(x, w1, g1, b1, w2, g2, b2):
    """Pure-JAX reference (NCHW), mirrors PyTorch training-mode BasicBlock."""
    def conv(x, w):
        return lax.conv_general_dilated(
            x, w, window_strides=(1, 1), padding=((1, 1), (1, 1)),
            dimension_numbers=("NCHW", "OIHW", "NCHW"))

    def bn_train(x, g, b):
        mu = jnp.mean(x, axis=(0, 2, 3), keepdims=True)
        var = jnp.mean((x - mu) ** 2, axis=(0, 2, 3), keepdims=True)
        return ((x - mu) * lax.rsqrt(var + EPS) * g.reshape(1, -1, 1, 1)
                + b.reshape(1, -1, 1, 1))

    out = jnp.maximum(bn_train(conv(x, w1), g1, b1), 0.0)
    out = bn_train(conv(out, w2), g2, b2)
    return jnp.maximum(out + x, 0.0)


if __name__ == "__main__":
    key = jax.random.PRNGKey(0)
    N, C, H, W = 2, 8, 16, 16                    # inplanes = planes = 8
    k1, k2, k3, k4, k5, k6, k7 = jax.random.split(key, 7)

    x = jax.random.normal(k1, (N, C, H, W), jnp.float32)
    w1 = jax.random.normal(k2, (C, C, 3, 3), jnp.float32) * 0.1   # conv1.weight (OIHW)
    w2 = jax.random.normal(k3, (C, C, 3, 3), jnp.float32) * 0.1   # conv2.weight (OIHW)
    g1 = jax.random.uniform(k4, (C,), jnp.float32, 0.5, 1.5)      # bn1.weight
    b1 = jax.random.normal(k5, (C,), jnp.float32) * 0.1           # bn1.bias
    g2 = jax.random.uniform(k6, (C,), jnp.float32, 0.5, 1.5)      # bn2.weight
    b2 = jax.random.normal(k7, (C,), jnp.float32) * 0.1           # bn2.bias

    out = basic_block_forward(x, w1, g1, b1, w2, g2, b2)
    out = jax.block_until_ready(out)

    ref = basic_block_reference(x, w1, g1, b1, w2, g2, b2)
    assert out.shape == x.shape and out.dtype == jnp.float32
    if not np.allclose(np.asarray(out), np.asarray(ref), atol=2e-3, rtol=2e-3):
        raise AssertionError("Pallas BasicBlock output does not match JAX reference")
    print("KERNEL_OK")
</pallas_src>

<mosaic_0001>
module attributes {stable_mosaic.version = 11 : i64} {
  func.func @_conv_bn_stats_kernel(%arg0: i32, %arg1: memref<1x8x256xf32, #tpu.memory_space<vmem>>, %arg2: memref<8x72xf32, #tpu.memory_space<vmem>>, %arg3: memref<2x256xf32, #tpu.memory_space<vmem>>, %arg4: memref<1x8x256xf32, #tpu.memory_space<vmem>>, %arg5: memref<1x8x2xf32, #tpu.memory_space<vmem>>, %arg6: memref<8x401xf32, #tpu.memory_space<vmem>>, %arg7: memref<72x256xf32, #tpu.memory_space<vmem>>) attributes {dimension_semantics = [#tpu.dimension_semantics<parallel>], iteration_bounds = array<i64: 2>, scalar_prefetch = 0 : i64, scratch_operands = 2 : i64, tpu.core_type = #tpu.core_type<tc>, window_params = [{transform_indices = @transform_0, window_bounds = array<i64: 1, 8, 256>}, {pipeline_mode = #tpu.pipeline_mode<synchronous>, transform_indices = @transform_1, window_bounds = array<i64: 8, 72>}, {pipeline_mode = #tpu.pipeline_mode<synchronous>, transform_indices = @transform_2, window_bounds = array<i64: 2, 256>}, {transform_indices = @transform_3, window_bounds = array<i64: 1, 8, 256>}, {transform_indices = @transform_4, window_bounds = array<i64: 1, 8, 2>}]} {
    %c0 = arith.constant 0 : index
    %c0_0 = arith.constant 0 : index
    %c0_1 = arith.constant 0 : index
    %0 = vector.load %arg1[%c0, %c0_0, %c0_1] : memref<1x8x256xf32, #tpu.memory_space<vmem>>, vector<1x8x256xf32>
    %1 = vector.shape_cast %0 : vector<1x8x256xf32> to vector<8x256xf32>
    %cst = arith.constant 0.000000e+00 : f32
    %2 = vector.broadcast %cst : f32 to vector<8x128xf32>
    %c0_2 = arith.constant 0 : index
    %c0_3 = arith.constant 0 : index
    %3 = vector.load %arg6[%c0_2, %c0_3] : memref<8x401xf32, #tpu.memory_space<vmem>>, vector<8x128xf32>
    tpu.vector_store %arg6[%c0_2, %c0_3], %2 {strides = array<i32>} : memref<8x401xf32, #tpu.memory_space<vmem>>, vector<8x128xf32>,
    %cst_4 = arith.constant 0.000000e+00 : f32
    %4 = vector.broadcast %cst_4 : f32 to vector<8x17xf32>
    %c0_5 = arith.constant 0 : index
    %c384 = arith.constant 384 : index
    %5 = vector.load %arg6[%c0_5, %c384] : memref<8x401xf32, #tpu.memory_space<vmem>>, vector<8x17xf32>
    tpu.vector_store %arg6[%c0_5, %c384], %4 {strides = array<i32>} : memref<8x401xf32, #tpu.memory_space<vmem>>, vector<8x17xf32>,
    %c0_6 = arith.constant 0 : index
    %c128 = arith.constant 128 : index
    %6 = vector.load %arg6[%c0_6, %c128] : memref<8x401xf32, #tpu.memory_space<vmem>>, vector<8x256xf32>
    tpu.vector_store %arg6[%c0_6, %c128], %1 {strides = array<i32>} : memref<8x401xf32, #tpu.memory_space<vmem>>, vector<8x256xf32>,
    %c0_7 = arith.constant 0 : index
    %c0_8 = arith.constant 0 : index
    %7 = vector.load %arg3[%c0_7, %c0_8] : memref<2x256xf32, #tpu.memory_space<vmem>>, vector<1x256xf32>
    %c1 = arith.constant 1 : index
    %c0_9 = arith.constant 0 : index
    %8 = vector.load %arg3[%c1, %c0_9] : memref<2x256xf32, #tpu.memory_space<vmem>>, vector<1x256xf32>
    %c0_10 = arith.constant 0 : index
    %c111 = arith.constant 111 : index
    %9 = vector.load %arg6[%c0_10, %c111] : memref<8x401xf32, #tpu.memory_space<vmem>>, vector<8x256xf32>
    %10 = vector.broadcast %7 : vector<1x256xf32> to vector<8x256xf32>
    %11 = arith.mulf %9, %10 : vector<8x256xf32>
    %c0_11 = arith.constant 0 : index
    %c0_12 = arith.constant 0 : index
    %12 = vector.load %arg7[%c0_11, %c0_12] : memref<72x256xf32, #tpu.memory_space<vmem>>, vector<8x256xf32>
    tpu.vector_store %arg7[%c0_11, %c0_12], %11 {strides = array<i32>} : memref<72x256xf32, #tpu.memory_space<vmem>>, vector<8x256xf32>,
    %c0_13 = arith.constant 0 : index
    %c112 = arith.constant 112 : index
    %13 = vector.load %arg6[%c0_13, %c112] : memref<8x401xf32, #tpu.memory_space<vmem>>, vector<8x256xf32>
    %c8 = arith.constant 8 : index
    %c0_14 = arith.constant 0 : index
    %14 = vector.load %arg7[%c8, %c0_14] : memref<72x256xf32, #tpu.memory_space<vmem>>, vector<8x256xf32>
    tpu.vector_store %arg7[%c8, %c0_14], %13 {strides = array<i32>} : memref<72x256xf32, #tpu.memory_space<vmem>>, vector<8x256xf32>,
    %c0_15 = arith.constant 0 : index
    %c113 = arith.constant 113 : index
    %15 = vector.load %arg6[%c0_15, %c113] : memref<8x401xf32, #tpu.memory_space<vmem>>, vector<8x256xf32>
    %16 = vector.broadcast %8 : vector<1x256xf32> to vector<8x256xf32>
    %17 = arith.mulf %15, %16 : vector<8x256xf32>
    %c16 = arith.constant 16 : index
    %c0_16 = arith.constant 0 : index
    %18 = vector.load %arg7[%c16, %c0_16] : memref<72x256xf32, #tpu.memory_space<vmem>>, vector<8x256xf32>
    tpu.vector_store %arg7[%c16, %c0_16], %17 {strides = array<i32>} : memref<72x256xf32, #tpu.memory_space<vmem>>, vector<8x256xf32>,
    %c0_17 = arith.constant 0 : index
    %c127 = arith.constant 127 : index
    %19 = vector.load %arg6[%c0_17, %c127] : memref<8x401xf32, #tpu.memory_space<vmem>>, vector<8x256xf32>
    %20 = vector.broadcast %7 : vector<1x256xf32> to vector<8x256xf32>
    %21 = arith.mulf %19, %20 : vector<8x256xf32>
    %c24 = arith.constant 24 : index
    %c0_18 = arith.constant 0 : index
    %22 = vector.load %arg7[%c24, %c0_18] : memref<72x256xf32, #tpu.memory_space<vmem>>, vector<8x256xf32>
    tpu.vector_store %arg7[%c24, %c0_18], %21 {strides = array<i32>} : memref<72x256xf32, #tpu.memory_space<vmem>>, vector<8x256xf32>,
    %c0_19 = arith.constant 0 : index
    %c128_20 = arith.constant 128 : index
    %23 = vector.load %arg6[%c0_19, %c128_20] : memref<8x401xf32, #tpu.memory_space<vmem>>, vector<8x256xf32>
    %c32 = arith.constant 32 : index
    %c0_21 = arith.constant 0 : index
    %24 = vector.load %arg7[%c32, %c0_21] : memref<72x256xf32, #tpu.memory_space<vmem>>, vector<8x256xf32>
    tpu.vector_store %arg7[%c32, %c0_21], %23 {strides = array<i32>} : memref<72x256xf32, #tpu.memory_space<vmem>>, vector<8x256xf32>,
    %c0_22 = arith.constant 0 : index
    %c129 = arith.constant 129 : index
    %25 = vector.load %arg6[%c0_22, %c129] : memref<8x401xf32, #tpu.memory_space<vmem>>, vector<8x256xf32>
    %26 = vector.broadcast %8 : vector<1x256xf32> to vector<8x256xf32>
    %27 = arith.mulf %25, %26 : vector<8x256xf32>
    %c40 = arith.constant 40 : index
    %c0_23 = arith.constant 0 : index
    %28 = vector.load %arg7[%c40, %c0_23] : memref<72x256xf32, #tpu.memory_space<vmem>>, vector<8x256xf32>
    tpu.vector_store %arg7[%c40, %c0_23], %27 {strides = array<i32>} : memref<72x256xf32, #tpu.memory_space<vmem>>, vector<8x256xf32>,
    %c0_24 = arith.constant 0 : index
    %c143 = arith.constant 143 : index
    %29 = vector.load %arg6[%c0_24, %c143] : memref<8x401xf32, #tpu.memory_space<vmem>>, vector<8x256xf32>
    %30 = vector.broadcast %7 : vector<1x256xf32> to vector<8x256xf32>
    %31 = arith.mulf %29, %30 : vector<8x256xf32>
    %c48 = arith.constant 48 : index
    %c0_25 = arith.constant 0 : index
    %32 = vector.load %arg7[%c48, %c0_25] : memref<72x256xf32, #tpu.memory_space<vmem>>, vector<8x256xf32>
    tpu.vector_store %arg7[%c48, %c0_25], %31 {strides = array<i32>} : memref<72x256xf32, #tpu.memory_space<vmem>>, vector<8x256xf32>,
    %c0_26 = arith.constant 0 : index
    %c144 = arith.constant 144 : index
    %33 = vector.load %arg6[%c0_26, %c144] : memref<8x401xf32, #tpu.memory_space<vmem>>, vector<8x256xf32>
    %c56 = arith.constant 56 : index
    %c0_27 = arith.constant 0 : index
    %34 = vector.load %arg7[%c56, %c0_27] : memref<72x256xf32, #tpu.memory_space<vmem>>, vector<8x256xf32>
    tpu.vector_store %arg7[%c56, %c0_27], %33 {strides = array<i32>} : memref<72x256xf32, #tpu.memory_space<vmem>>, vector<8x256xf32>,
    %c0_28 = arith.constant 0 : index
    %c145 = arith.constant 145 : index
    %35 = vector.load %arg6[%c0_28, %c145] : memref<8x401xf32, #tpu.memory_space<vmem>>, vector<8x256xf32>
    %36 = vector.broadcast %8 : vector<1x256xf32> to vector<8x256xf32>
    %37 = arith.mulf %35, %36 : vector<8x256xf32>
    %c64 = arith.constant 64 : index
    %c0_29 = arith.constant 0 : index
    %38 = vector.load %arg7[%c64, %c0_29] : memref<72x256xf32, #tpu.memory_space<vmem>>, vector<8x256xf32>
    tpu.vector_store %arg7[%c64, %c0_29], %37 {strides = array<i32>} : memref<72x256xf32, #tpu.memory_space<vmem>>, vector<8x256xf32>,
    %c0_30 = arith.constant 0 : index
    %c0_31 = arith.constant 0 : index
    %39 = vector.load %arg2[%c0_30, %c0_31] : memref<8x72xf32, #tpu.memory_space<vmem>>, vector<8x72xf32>
    %c0_32 = arith.constant 0 : index
    %c0_33 = arith.constant 0 : index
    %40 = vector.load %arg7[%c0_32, %c0_33] : memref<72x256xf32, #tpu.memory_space<vmem>>, vector<72x256xf32>
    %cst_34 = arith.constant dense<0.000000e+00> : vector<8x256xf32>
    %41 = tpu.matmul %39, %40, %cst_34 {dimension_numbers = #tpu.dot_dimension_numbers<[1], [0], [0], [1], [0, 0, 1, 1], [], []>} : vector<8x72xf32>, vector<72x256xf32>, vector<8x256xf32> -> vector<8x256xf32>
    %c0_35 = arith.constant 0 : index
    %c0_36 = arith.constant 0 : index
    %c0_37 = arith.constant 0 : index
    %42 = vector.load %arg4[%c0_35, %c0_36, %c0_37] : memref<1x8x256xf32, #tpu.memory_space<vmem>>, vector<1x8x256xf32>
    %43 = vector.shape_cast %42 : vector<1x8x256xf32> to vector<8x256xf32>
    %44 = vector.shape_cast %41 : vector<8x256xf32> to vector<1x8x256xf32>
    tpu.vector_store %arg4[%c0_35, %c0_36, %c0_37], %44 {strides = array<i32>} : memref<1x8x256xf32, #tpu.memory_space<vmem>>, vector<1x8x256xf32>,
    %cst_38 = arith.constant dense<0.000000e+00> : vector<8xf32>
    %45 = vector.multi_reduction <add>, %41, %cst_38 [1] : vector<8x256xf32> to vector<8xf32>
    %46 = vector.shape_cast %45 : vector<8xf32> to vector<8x1xf32>
    %c0_39 = arith.constant 0 : index
    %c0_40 = arith.constant 0 : index
    %c0_41 = arith.constant 0 : index
    %47 = vector.load %arg5[%c0_39, %c0_40, %c0_41] : memref<1x8x2xf32, #tpu.memory_space<vmem>>, vector<1x8x1xf32>
    %48 = vector.shape_cast %47 : vector<1x8x1xf32> to vector<8x1xf32>
    %49 = vector.shape_cast %46 : vector<8x1xf32> to vector<1x8x1xf32>
    tpu.vector_store %arg5[%c0_39, %c0_40, %c0_41], %49 {strides = array<i32>} : memref<1x8x2xf32, #tpu.memory_space<vmem>>, vector<1x8x1xf32>,
    %50 = arith.mulf %41, %41 : vector<8x256xf32>
    %cst_42 = arith.constant dense<0.000000e+00> : vector<8xf32>
    %51 = vector.multi_reduction <add>, %50, %cst_42 [1] : vector<8x256xf32> to vector<8xf32>
    %52 = vector.shape_cast %51 : vector<8xf32> to vector<8x1xf32>
    %c0_43 = arith.constant 0 : index
    %c0_44 = arith.constant 0 : index
    %c1_45 = arith.constant 1 : index
    %53 = vector.load %arg5[%c0_43, %c0_44, %c1_45] : memref<1x8x2xf32, #tpu.memory_space<vmem>>, vector<1x8x1xf32>
    %54 = vector.shape_cast %53 : vector<1x8x1xf32> to vector<8x1xf32>
    %55 = vector.shape_cast %52 : vector<8x1xf32> to vector<1x8x1xf32>
    tpu.vector_store %arg5[%c0_43, %c0_44, %c1_45], %55 {strides = array<i32>} : memref<1x8x2xf32, #tpu.memory_space<vmem>>, vector<1x8x1xf32>,
    return
  }
  func.func @transform_0(%arg0: i32) -> (i32, i32, i32) {
    %c0_i32 = arith.constant 0 : i32
    %c0_i32_0 = arith.constant 0 : i32
    %c0_i32_1 = arith.constant 0 : i32
    return %arg0, %c0_i32, %c0_i32_0 : i32, i32, i32
  }
  func.func @transform_1(%arg0: i32) -> (i32, i32) {
    %c0_i32 = arith.constant 0 : i32
    %c0_i32_0 = arith.constant 0 : i32
    %c0_i32_1 = arith.constant 0 : i32
    return %c0_i32, %c0_i32_0 : i32, i32
  }
  func.func @transform_2(%arg0: i32) -> (i32, i32) {
    %c0_i32 = arith.constant 0 : i32
    %c0_i32_0 = arith.constant 0 : i32
    %c0_i32_1 = arith.constant 0 : i32
    return %c0_i32, %c0_i32_0 : i32, i32
  }
  func.func @transform_3(%arg0: i32) -> (i32, i32, i32) {
    %c0_i32 = arith.constant 0 : i32
    %c0_i32_0 = arith.constant 0 : i32
    %c0_i32_1 = arith.constant 0 : i32
    return %arg0, %c0_i32, %c0_i32_0 : i32, i32, i32
  }
  func.func @transform_4(%arg0: i32) -> (i32, i32, i32) {
    %c0_i32 = arith.constant 0 : i32
    %c0_i32_0 = arith.constant 0 : i32
    %c0_i32_1 = arith.constant 0 : i32
    return %arg0, %c0_i32, %c0_i32_0 : i32, i32, i32
  }
}

module attributes {stable_mosaic.version = 11 : i64} {
  func.func @_conv_bn_stats_kernel(%arg0: i32, %arg1: memref<1x8x256xf32, #tpu.memory_space<vmem>>, %arg2: memref<8x72xf32, #tpu.memory_space<vmem>>, %arg3: memref<2x256xf32, #tpu.memory_space<vmem>>, %arg4: memref<8x1xf32, #tpu.memory_space<vmem>>, %arg5: memref<8x1xf32, #tpu.memory_space<vmem>>, %arg6: memref<1x8x256xf32, #tpu.memory_space<vmem>>, %arg7: memref<1x8x2xf32, #tpu.memory_space<vmem>>, %arg8: memref<8x401xf32, #tpu.memory_space<vmem>>, %arg9: memref<72x256xf32, #tpu.memory_space<vmem>>) attributes {dimension_semantics = [#tpu.dimension_semantics<parallel>], iteration_bounds = array<i64: 2>, scalar_prefetch = 0 : i64, scratch_operands = 2 : i64, tpu.core_type = #tpu.core_type<tc>, window_params = [{transform_indices = @transform_0, window_bounds = array<i64: 1, 8, 256>}, {pipeline_mode = #tpu.pipeline_mode<synchronous>, transform_indices = @transform_1, window_bounds = array<i64: 8, 72>}, {pipeline_mode = #tpu.pipeline_mode<synchronous>, transform_indices = @transform_2, window_bounds = array<i64: 2, 256>}, {pipeline_mode = #tpu.pipeline_mode<synchronous>, transform_indices = @transform_3, window_bounds = array<i64: 8, 1>}, {pipeline_mode = #tpu.pipeline_mode<synchronous>, transform_indices = @transform_4, window_bounds = array<i64: 8, 1>}, {transform_indices = @transform_5, window_bounds = array<i64: 1, 8, 256>}, {transform_indices = @transform_6, window_bounds = array<i64: 1, 8, 2>}]} {
    %c0 = arith.constant 0 : index
    %c0_0 = arith.constant 0 : index
    %c0_1 = arith.constant 0 : index
    %0 = vector.load %arg1[%c0, %c0_0, %c0_1] : memref<1x8x256xf32, #tpu.memory_space<vmem>>, vector<1x8x256xf32>
    %1 = vector.shape_cast %0 : vector<1x8x256xf32> to vector<8x256xf32>
    %c0_2 = arith.constant 0 : index
    %c0_3 = arith.constant 0 : index
    %2 = vector.load %arg4[%c0_2, %c0_3] : memref<8x1xf32, #tpu.memory_space<vmem>>, vector<8x1xf32>
    %3 = vector.broadcast %2 : vector<8x1xf32> to vector<8x256xf32>
    %4 = arith.mulf %1, %3 : vector<8x256xf32>
    %c0_4 = arith.constant 0 : index
    %c0_5 = arith.constant 0 : index
    %5 = vector.load %arg5[%c0_4, %c0_5] : memref<8x1xf32, #tpu.memory_space<vmem>>, vector<8x1xf32>
    %6 = vector.broadcast %5 : vector<8x1xf32> to vector<8x256xf32>
    %7 = arith.addf %4, %6 : vector<8x256xf32>
    %cst = arith.constant 0.000000e+00 : f32
    %8 = vector.broadcast %cst : f32 to vector<8x256xf32>
    %9 = arith.maximumf %7, %8 : vector<8x256xf32>
    %cst_6 = arith.constant 0.000000e+00 : f32
    %10 = vector.broadcast %cst_6 : f32 to vector<8x128xf32>
    %c0_7 = arith.constant 0 : index
    %c0_8 = arith.constant 0 : index
    %11 = vector.load %arg8[%c0_7, %c0_8] : memref<8x401xf32, #tpu.memory_space<vmem>>, vector<8x128xf32>
    tpu.vector_store %arg8[%c0_7, %c0_8], %10 {strides = array<i32>} : memref<8x401xf32, #tpu.memory_space<vmem>>, vector<8x128xf32>,
    %cst_9 = arith.constant 0.000000e+00 : f32
    %12 = vector.broadcast %cst_9 : f32 to vector<8x17xf32>
    %c0_10 = arith.constant 0 : index
    %c384 = arith.constant 384 : index
    %13 = vector.load %arg8[%c0_10, %c384] : memref<8x401xf32, #tpu.memory_space<vmem>>, vector<8x17xf32>
    tpu.vector_store %arg8[%c0_10, %c384], %12 {strides = array<i32>} : memref<8x401xf32, #tpu.memory_space<vmem>>, vector<8x17xf32>,
    %c0_11 = arith.constant 0 : index
    %c128 = arith.constant 128 : index
    %14 = vector.load %arg8[%c0_11, %c128] : memref<8x401xf32, #tpu.memory_space<vmem>>, vector<8x256xf32>
    tpu.vector_store %arg8[%c0_11, %c128], %9 {strides = array<i32>} : memref<8x401xf32, #tpu.memory_space<vmem>>, vector<8x256xf32>,
    %c0_12 = arith.constant 0 : index
    %c0_13 = arith.constant 0 : index
    %15 = vector.load %arg3[%c0_12, %c0_13] : memref<2x256xf32, #tpu.memory_space<vmem>>, vector<1x256xf32>
    %c1 = arith.constant 1 : index
    %c0_14 = arith.constant 0 : index
    %16 = vector.load %arg3[%c1, %c0_14] : memref<2x256xf32, #tpu.memory_space<vmem>>, vector<1x256xf32>
    %c0_15 = arith.constant 0 : index
    %c111 = arith.constant 111 : index
    %17 = vector.load %arg8[%c0_15, %c111] : memref<8x401xf32, #tpu.memory_space<vmem>>, vector<8x256xf32>
    %18 = vector.broadcast %15 : vector<1x256xf32> to vector<8x256xf32>
    %19 = arith.mulf %17, %18 : vector<8x256xf32>
    %c0_16 = arith.constant 0 : index
    %c0_17 = arith.constant 0 : index
    %20 = vector.load %arg9[%c0_16, %c0_17] : memref<72x256xf32, #tpu.memory_space<vmem>>, vector<8x256xf32>
    tpu.vector_store %arg9[%c0_16, %c0_17], %19 {strides = array<i32>} : memref<72x256xf32, #tpu.memory_space<vmem>>, vector<8x256xf32>,
    %c0_18 = arith.constant 0 : index
    %c112 = arith.constant 112 : index
    %21 = vector.load %arg8[%c0_18, %c112] : memref<8x401xf32, #tpu.memory_space<vmem>>, vector<8x256xf32>
    %c8 = arith.constant 8 : index
    %c0_19 = arith.constant 0 : index
    %22 = vector.load %arg9[%c8, %c0_19] : memref<72x256xf32, #tpu.memory_space<vmem>>, vector<8x256xf32>
    tpu.vector_store %arg9[%c8, %c0_19], %21 {strides = array<i32>} : memref<72x256xf32, #tpu.memory_space<vmem>>, vector<8x256xf32>,
    %c0_20 = arith.constant 0 : index
    %c113 = arith.constant 113 : index
    %23 = vector.load %arg8[%c0_20, %c113] : memref<8x401xf32, #tpu.memory_space<vmem>>, vector<8x256xf32>
    %24 = vector.broadcast %16 : vector<1x256xf32> to vector<8x256xf32>
    %25 = arith.mulf %23, %24 : vector<8x256xf32>
    %c16 = arith.constant 16 : index
    %c0_21 = arith.constant 0 : index
    %26 = vector.load %arg9[%c16, %c0_21] : memref<72x256xf32, #tpu.memory_space<vmem>>, vector<8x256xf32>
    tpu.vector_store %arg9[%c16, %c0_21], %25 {strides = array<i32>} : memref<72x256xf32, #tpu.memory_space<vmem>>, vector<8x256xf32>,
    %c0_22 = arith.constant 0 : index
    %c127 = arith.constant 127 : index
    %27 = vector.load %arg8[%c0_22, %c127] : memref<8x401xf32, #tpu.memory_space<vmem>>, vector<8x256xf32>
    %28 = vector.broadcast %15 : vector<1x256xf32> to vector<8x256xf32>
    %29 = arith.mulf %27, %28 : vector<8x256xf32>
    %c24 = arith.constant 24 : index
    %c0_23 = arith.constant 0 : index
    %30 = vector.load %arg9[%c24, %c0_23] : memref<72x256xf32, #tpu.memory_space<vmem>>, vector<8x256xf32>
    tpu.vector_store %arg9[%c24, %c0_23], %29 {strides = array<i32>} : memref<72x256xf32, #tpu.memory_space<vmem>>, vector<8x256xf32>,
    %c0_24 = arith.constant 0 : index
    %c128_25 = arith.constant 128 : index
    %31 = vector.load %arg8[%c0_24, %c128_25] : memref<8x401xf32, #tpu.memory_space<vmem>>, vector<8x256xf32>
    %c32 = arith.constant 32 : index
    %c0_26 = arith.constant 0 : index
    %32 = vector.load %arg9[%c32, %c0_26] : memref<72x256xf32, #tpu.memory_space<vmem>>, vector<8x256xf32>
    tpu.vector_store %arg9[%c32, %c0_26], %31 {strides = array<i32>} : memref<72x256xf32, #tpu.memory_space<vmem>>, vector<8x256xf32>,
    %c0_27 = arith.constant 0 : index
    %c129 = arith.constant 129 : index
    %33 = vector.load %arg8[%c0_27, %c129] : memref<8x401xf32, #tpu.memory_space<vmem>>, vector<8x256xf32>
    %34 = vector.broadcast %16 : vector<1x256xf32> to vector<8x256xf32>
    %35 = arith.mulf %33, %34 : vector<8x256xf32>
    %c40 = arith.constant 40 : index
    %c0_28 = arith.constant 0 : index
    %36 = vector.load %arg9[%c40, %c0_28] : memref<72x256xf32, #tpu.memory_space<vmem>>, vector<8x256xf32>
    tpu.vector_store %arg9[%c40, %c0_28], %35 {strides = array<i32>} : memref<72x256xf32, #tpu.memory_space<vmem>>, vector<8x256xf32>,
    %c0_29 = arith.constant 0 : index
    %c143 = arith.constant 143 : index
    %37 = vector.load %arg8[%c0_29, %c143] : memref<8x401xf32, #tpu.memory_space<vmem>>, vector<8x256xf32>
    %38 = vector.broadcast %15 : vector<1x256xf32> to vector<8x256xf32>
    %39 = arith.mulf %37, %38 : vector<8x256xf32>
    %c48 = arith.constant 48 : index
    %c0_30 = arith.constant 0 : index
    %40 = vector.load %arg9[%c48, %c0_30] : memref<72x256xf32, #tpu.memory_space<vmem>>, vector<8x256xf32>
    tpu.vector_store %arg9[%c48, %c0_30], %39 {strides = array<i32>} : memref<72x256xf32, #tpu.memory_space<vmem>>, vector<8x256xf32>,
    %c0_31 = arith.constant 0 : index
    %c144 = arith.constant 144 : index
    %41 = vector.load %arg8[%c0_31, %c144] : memref<8x401xf32, #tpu.memory_space<vmem>>, vector<8x256xf32>
    %c56 = arith.constant 56 : index
    %c0_32 = arith.constant 0 : index
    %42 = vector.load %arg9[%c56, %c0_32] : memref<72x256xf32, #tpu.memory_space<vmem>>, vector<8x256xf32>
    tpu.vector_store %arg9[%c56, %c0_32], %41 {strides = array<i32>} : memref<72x256xf32, #tpu.memory_space<vmem>>, vector<8x256xf32>,
    %c0_33 = arith.constant 0 : index
    %c145 = arith.constant 145 : index
    %43 = vector.load %arg8[%c0_33, %c145] : memref<8x401xf32, #tpu.memory_space<vmem>>, vector<8x256xf32>
    %44 = vector.broadcast %16 : vector<1x256xf32> to vector<8x256xf32>
    %45 = arith.mulf %43, %44 : vector<8x256xf32>
    %c64 = arith.constant 64 : index
    %c0_34 = arith.constant 0 : index
    %46 = vector.load %arg9[%c64, %c0_34] : memref<72x256xf32, #tpu.memory_space<vmem>>, vector<8x256xf32>
    tpu.vector_store %arg9[%c64, %c0_34], %45 {strides = array<i32>} : memref<72x256xf32, #tpu.memory_space<vmem>>, vector<8x256xf32>,
    %c0_35 = arith.constant 0 : index
    %c0_36 = arith.constant 0 : index
    %47 = vector.load %arg2[%c0_35, %c0_36] : memref<8x72xf32, #tpu.memory_space<vmem>>, vector<8x72xf32>
    %c0_37 = arith.constant 0 : index
    %c0_38 = arith.constant 0 : index
    %48 = vector.load %arg9[%c0_37, %c0_38] : memref<72x256xf32, #tpu.memory_space<vmem>>, vector<72x256xf32>
    %cst_39 = arith.constant dense<0.000000e+00> : vector<8x256xf32>
    %49 = tpu.matmul %47, %48, %cst_39 {dimension_numbers = #tpu.dot_dimension_numbers<[1], [0], [0], [1], [0, 0, 1, 1], [], []>} : vector<8x72xf32>, vector<72x256xf32>, vector<8x256xf32> -> vector<8x256xf32>
    %c0_40 = arith.constant 0 : index
    %c0_41 = arith.constant 0 : index
    %c0_42 = arith.constant 0 : index
    %50 = vector.load %arg6[%c0_40, %c0_41, %c0_42] : memref<1x8x256xf32, #tpu.memory_space<vmem>>, vector<1x8x256xf32>
    %51 = vector.shape_cast %50 : vector<1x8x256xf32> to vector<8x256xf32>
    %52 = vector.shape_cast %49 : vector<8x256xf32> to vector<1x8x256xf32>
    tpu.vector_store %arg6[%c0_40, %c0_41, %c0_42], %52 {strides = array<i32>} : memref<1x8x256xf32, #tpu.memory_space<vmem>>, vector<1x8x256xf32>,
    %cst_43 = arith.constant dense<0.000000e+00> : vector<8xf32>
    %53 = vector.multi_reduction <add>, %49, %cst_43 [1] : vector<8x256xf32> to vector<8xf32>
    %54 = vector.shape_cast %53 : vector<8xf32> to vector<8x1xf32>
    %c0_44 = arith.constant 0 : index
    %c0_45 = arith.constant 0 : index
    %c0_46 = arith.constant 0 : index
    %55 = vector.load %arg7[%c0_44, %c0_45, %c0_46] : memref<1x8x2xf32, #tpu.memory_space<vmem>>, vector<1x8x1xf32>
    %56 = vector.shape_cast %55 : vector<1x8x1xf32> to vector<8x1xf32>
    %57 = vector.shape_cast %54 : vector<8x1xf32> to vector<1x8x1xf32>
    tpu.vector_store %arg7[%c0_44, %c0_45, %c0_46], %57 {strides = array<i32>} : memref<1x8x2xf32, #tpu.memory_space<vmem>>, vector<1x8x1xf32>,
    %58 = arith.mulf %49, %49 : vector<8x256xf32>
    %cst_47 = arith.constant dense<0.000000e+00> : vector<8xf32>
    %59 = vector.multi_reduction <add>, %58, %cst_47 [1] : vector<8x256xf32> to vector<8xf32>
    %60 = vector.shape_cast %59 : vector<8xf32> to vector<8x1xf32>
    %c0_48 = arith.constant 0 : index
    %c0_49 = arith.constant 0 : index
    %c1_50 = arith.constant 1 : index
    %61 = vector.load %arg7[%c0_48, %c0_49, %c1_50] : memref<1x8x2xf32, #tpu.memory_space<vmem>>, vector<1x8x1xf32>
    %62 = vector.shape_cast %61 : vector<1x8x1xf32> to vector<8x1xf32>
    %63 = vector.shape_cast %60 : vector<8x1xf32> to vector<1x8x1xf32>
    tpu.vector_store %arg7[%c0_48, %c0_49, %c1_50], %63 {strides = array<i32>} : memref<1x8x2xf32, #tpu.memory_space<vmem>>, vector<1x8x1xf32>,
    return
  }
  func.func @transform_0(%arg0: i32) -> (i32, i32, i32) {
    %c0_i32 = arith.constant 0 : i32
    %c0_i32_0 = arith.constant 0 : i32
    %c0_i32_1 = arith.constant 0 : i32
    return %arg0, %c0_i32, %c0_i32_0 : i32, i32, i32
  }
  func.func @transform_1(%arg0: i32) -> (i32, i32) {
    %c0_i32 = arith.constant 0 : i32
    %c0_i32_0 = arith.constant 0 : i32
    %c0_i32_1 = arith.constant 0 : i32
    return %c0_i32, %c0_i32_0 : i32, i32
  }
  func.func @transform_2(%arg0: i32) -> (i32, i32) {
    %c0_i32 = arith.constant 0 : i32
    %c0_i32_0 = arith.constant 0 : i32
    %c0_i32_1 = arith.constant 0 : i32
    return %c0_i32, %c0_i32_0 : i32, i32
  }
  func.func @transform_3(%arg0: i32) -> (i32, i32) {
    %c0_i32 = arith.constant 0 : i32
    %c0_i32_0 = arith.constant 0 : i32
    %c0_i32_1 = arith.constant 0 : i32
    return %c0_i32, %c0_i32_0 : i32, i32
  }
  func.func @transform_4(%arg0: i32) -> (i32, i32) {
    %c0_i32 = arith.constant 0 : i32
    %c0_i32_0 = arith.constant 0 : i32
    %c0_i32_1 = arith.constant 0 : i32
    return %c0_i32, %c0_i32_0 : i32, i32
  }
  func.func @transform_5(%arg0: i32) -> (i32, i32, i32) {
    %c0_i32 = arith.constant 0 : i32
    %c0_i32_0 = arith.constant 0 : i32
    %c0_i32_1 = arith.constant 0 : i32
    return %arg0, %c0_i32, %c0_i32_0 : i32, i32, i32
  }
  func.func @transform_6(%arg0: i32) -> (i32, i32, i32) {
    %c0_i32 = arith.constant 0 : i32
    %c0_i32_0 = arith.constant 0 : i32
    %c0_i32_1 = arith.constant 0 : i32
    return %arg0, %c0_i32, %c0_i32_0 : i32, i32, i32
  }
}

module attributes {stable_mosaic.version = 11 : i64} {
  func.func @_bn_add_relu_kernel(%arg0: i32, %arg1: memref<1x8x256xf32, #tpu.memory_space<vmem>>, %arg2: memref<1x8x256xf32, #tpu.memory_space<vmem>>, %arg3: memref<8x1xf32, #tpu.memory_space<vmem>>, %arg4: memref<8x1xf32, #tpu.memory_space<vmem>>, %arg5: memref<1x8x256xf32, #tpu.memory_space<vmem>>) attributes {dimension_semantics = [#tpu.dimension_semantics<parallel>], iteration_bounds = array<i64: 2>, scalar_prefetch = 0 : i64, scratch_operands = 0 : i64, tpu.core_type = #tpu.core_type<tc>, window_params = [{transform_indices = @transform_0, window_bounds = array<i64: 1, 8, 256>}, {transform_indices = @transform_1, window_bounds = array<i64: 1, 8, 256>}, {pipeline_mode = #tpu.pipeline_mode<synchronous>, transform_indices = @transform_2, window_bounds = array<i64: 8, 1>}, {pipeline_mode = #tpu.pipeline_mode<synchronous>, transform_indices = @transform_3, window_bounds = array<i64: 8, 1>}, {transform_indices = @transform_4, window_bounds = array<i64: 1, 8, 256>}]} {
    %c0 = arith.constant 0 : index
    %c0_0 = arith.constant 0 : index
    %c0_1 = arith.constant 0 : index
    %0 = vector.load %arg1[%c0, %c0_0, %c0_1] : memref<1x8x256xf32, #tpu.memory_space<vmem>>, vector<1x8x256xf32>
    %1 = vector.shape_cast %0 : vector<1x8x256xf32> to vector<8x256xf32>
    %c0_2 = arith.constant 0 : index
    %c0_3 = arith.constant 0 : index
    %2 = vector.load %arg3[%c0_2, %c0_3] : memref<8x1xf32, #tpu.memory_space<vmem>>, vector<8x1xf32>
    %3 = vector.broadcast %2 : vector<8x1xf32> to vector<8x256xf32>
    %4 = arith.mulf %1, %3 : vector<8x256xf32>
    %c0_4 = arith.constant 0 : index
    %c0_5 = arith.constant 0 : index
    %5 = vector.load %arg4[%c0_4, %c0_5] : memref<8x1xf32, #tpu.memory_space<vmem>>, vector<8x1xf32>
    %6 = vector.broadcast %5 : vector<8x1xf32> to vector<8x256xf32>
    %7 = arith.addf %4, %6 : vector<8x256xf32>
    %c0_6 = arith.constant 0 : index
    %c0_7 = arith.constant 0 : index
    %c0_8 = arith.constant 0 : index
    %8 = vector.load %arg2[%c0_6, %c0_7, %c0_8] : memref<1x8x256xf32, #tpu.memory_space<vmem>>, vector<1x8x256xf32>
    %9 = vector.shape_cast %8 : vector<1x8x256xf32> to vector<8x256xf32>
    %10 = arith.addf %7, %9 : vector<8x256xf32>
    %cst = arith.constant 0.000000e+00 : f32
    %11 = vector.broadcast %cst : f32 to vector<8x256xf32>
    %12 = arith.maximumf %10, %11 : vector<8x256xf32>
    %c0_9 = arith.constant 0 : index
    %c0_10 = arith.constant 0 : index
    %c0_11 = arith.constant 0 : index
    %13 = vector.load %arg5[%c0_9, %c0_10, %c0_11] : memref<1x8x256xf32, #tpu.memory_space<vmem>>, vector<1x8x256xf32>
    %14 = vector.shape_cast %13 : vector<1x8x256xf32> to vector<8x256xf32>
    %15 = vector.shape_cast %12 : vector<8x256xf32> to vector<1x8x256xf32>
    tpu.vector_store %arg5[%c0_9, %c0_10, %c0_11], %15 {strides = array<i32>} : memref<1x8x256xf32, #tpu.memory_space<vmem>>, vector<1x8x256xf32>,
    return
  }
  func.func @transform_0(%arg0: i32) -> (i32, i32, i32) {
    %c0_i32 = arith.constant 0 : i32
    %c0_i32_0 = arith.constant 0 : i32
    %c0_i32_1 = arith.constant 0 : i32
    return %arg0, %c0_i32, %c0_i32_0 : i32, i32, i32
  }
  func.func @transform_1(%arg0: i32) -> (i32, i32, i32) {
    %c0_i32 = arith.constant 0 : i32
    %c0_i32_0 = arith.constant 0 : i32
    %c0_i32_1 = arith.constant 0 : i32
    return %arg0, %c0_i32, %c0_i32_0 : i32, i32, i32
  }
  func.func @transform_2(%arg0: i32) -> (i32, i32) {
    %c0_i32 = arith.constant 0 : i32
    %c0_i32_0 = arith.constant 0 : i32
    %c0_i32_1 = arith.constant 0 : i32
    return %c0_i32, %c0_i32_0 : i32, i32
  }
  func.func @transform_3(%arg0: i32) -> (i32, i32) {
    %c0_i32 = arith.constant 0 : i32
    %c0_i32_0 = arith.constant 0 : i32
    %c0_i32_1 = arith.constant 0 : i32
    return %c0_i32, %c0_i32_0 : i32, i32
  }
  func.func @transform_4(%arg0: i32) -> (i32, i32, i32) {
    %c0_i32 = arith.constant 0 : i32
    %c0_i32_0 = arith.constant 0 : i32
    %c0_i32_1 = arith.constant 0 : i32
    return %arg0, %c0_i32, %c0_i32_0 : i32, i32, i32
  }
}

</mosaic_0001>

<llo_original>
// kernel: basic_block_forward.5
$region0: #{basic_block_forward.5}
  #allocation0 [shape = 'u32[]', space=smem, size = 0x4, offset = 0x4, fixed_abs, tag = 'smem constant byte address 0x4 - core index']
  #allocation1 [shape = 'u32[144,128]{1,0:T(1,128)}', space=vmem, size = 0x12000, scoped, tag = 'internal scratch']
  %s0 = inlined_call_operand.vmem [shape: f32[2,8,256], index: 0, kind: input, shape index: {}, may-alias: {0,4}]
  %s1 = inlined_call_operand.vmem [shape: f32[2,8,256], index: 1, kind: input, shape index: {}]
  %s2 = inlined_call_operand.vmem [shape: f32[8,1], index: 2, kind: input, shape index: {}]
  %s3 = inlined_call_operand.vmem [shape: f32[8,1], index: 3, kind: input, shape index: {}]
  %s4 = inlined_call_operand.vmem [shape: f32[2,8,256], index: 4, kind: output, shape index: {}, may-alias: {0,4}]
  %s5 = sld [smem:[#allocation0]]
  $region49: #{basic_block_forward.5} parent=0
    _
  %s7 = ssub.s32 1, %s5
  %s8 = scalar_select 0, %s7, %s5
  loop: start=0, step=1, limit=4
  $region2: #{basic_block_forward.5} parent=0 // loop_pre_header
    _
  $region3: #{basic_block_forward.5} parent=0 // loop_header
    %s10 = sphi 0, %s14
    %p11 = scmp.ge.s32.totalorder %s10, 4
    %s20 = sphi 0, %s22
    %s23 = sphi 0, %s20
    %s24 = sphi 0, %s23
    %s40 = sphi 0, %s24
    %s46 = sphi 0, %s48
    %s49 = sphi 0, %s46
    %s50 = sphi 0, %s49
    %s66 = sphi 0, %s50
    %s70 = sphi 0, %s70
    %s72 = sphi 0, %s70
    %s73 = sphi 0, %s72
    %s87 = sphi 0, %s73
    %s91 = sphi 0, %s91
    %s93 = sphi 0, %s91
    %s94 = sphi 0, %s93
    %s108 = sphi 0, %s94
    %s114 = sphi 0, %s116
    %s117 = sphi 0, %s114
    %s118 = sphi 0, %s117
    %s134 = sphi 0, %s118
  $region4: #{basic_block_forward.5} parent=0 // loop_header_branch
    %13 = sbr.rel (%p11) target = $region8
  $region5: #{basic_block_forward.5} parent=0 // loop_body
    %s15 = ssub.s32 %s10, 1
    %s16 = ssub.s32 %s10, 2
    %s17 = sadd.s32 %s10, 1
    %s18 = ssub.s32 %s10, %s17
    %p19 = scmp.eq.s32.totalorder %s18, 0
    %s21 = sadd.s32 %s20, 1
    %s22 = scalar_select %p19, %s20, %s21
    %p25 = pneg %p19
    %p26 = scmp.eq.s32.totalorder %s10, 1
    %p27 = por %p25, %p26
    %p28 = scmp.ne.s32.totalorder %s20, %s23
    %p29 = scmp.eq.s32.totalorder %s10, 0
    %p30 = por %p28, %p29
    %p31 = scmp.ne.s32.totalorder %s20, %s23
    %p32 = scmp.eq.s32.totalorder %s15, 1
    %p33 = por %p31, %p32
    %p34 = scmp.ne.s32.totalorder %s23, %s24
    %p35 = scmp.eq.s32.totalorder %s15, 0
    %p36 = por %p34, %p35
    %p37 = scmp.ne.s32.totalorder %s23, %s24
    %p38 = scmp.eq.s32.totalorder %s16, 1
    %p39 = por %p37, %p38
    %p41 = scmp.ne.s32.totalorder %s24, %s40
    %p42 = scmp.eq.s32.totalorder %s16, 0
    %p43 = por %p41, %p42
    %s44 = ssub.s32 %s10, %s17
    %p45 = scmp.eq.s32.totalorder %s44, 0
    %s47 = sadd.s32 %s46, 1
    %s48 = scalar_select %p45, %s46, %s47
    %p51 = pneg %p45
    %p52 = scmp.eq.s32.totalorder %s10, 1
    %p53 = por %p51, %p52
    %p54 = scmp.ne.s32.totalorder %s46, %s49
    %p55 = scmp.eq.s32.totalorder %s10, 0
    %p56 = por %p54, %p55
    %p57 = scmp.ne.s32.totalorder %s46, %s49
    %p58 = scmp.eq.s32.totalorder %s15, 1
    %p59 = por %p57, %p58
    %p60 = scmp.ne.s32.totalorder %s49, %s50
    %p61 = scmp.eq.s32.totalorder %s15, 0
    %p62 = por %p60, %p61
    %p63 = scmp.ne.s32.totalorder %s49, %s50
    %p64 = scmp.eq.s32.totalorder %s16, 1
    %p65 = por %p63, %p64
    %p67 = scmp.ne.s32.totalorder %s50, %s66
    %p68 = scmp.eq.s32.totalorder %s16, 0
    %p69 = por %p67, %p68
    %s71 = sadd.s32 %s70, 1
    %p74 = scmp.eq.s32.totalorder %s10, 1
    %p75 = scmp.ne.s32.totalorder %s70, %s72
    %p76 = scmp.eq.s32.totalorder %s10, 0
    %p77 = por %p75, %p76
    %p78 = scmp.ne.s32.totalorder %s70, %s72
    %p79 = scmp.eq.s32.totalorder %s15, 1
    %p80 = por %p78, %p79
    %p81 = scmp.ne.s32.totalorder %s72, %s73
    %p82 = scmp.eq.s32.totalorder %s15, 0
    %p83 = por %p81, %p82
    %p84 = scmp.ne.s32.totalorder %s72, %s73
    %p85 = scmp.eq.s32.totalorder %s16, 1
    %p86 = por %p84, %p85
    %p88 = scmp.ne.s32.totalorder %s73, %s87
    %p89 = scmp.eq.s32.totalorder %s16, 0
    %p90 = por %p88, %p89
    %s92 = sadd.s32 %s91, 1
    %p95 = scmp.eq.s32.totalorder %s10, 1
    %p96 = scmp.ne.s32.totalorder %s91, %s93
    %p97 = scmp.eq.s32.totalorder %s10, 0
    %p98 = por %p96, %p97
    %p99 = scmp.ne.s32.totalorder %s91, %s93
    %p100 = scmp.eq.s32.totalorder %s15, 1
    %p101 = por %p99, %p100
    %p102 = scmp.ne.s32.totalorder %s93, %s94
    %p103 = scmp.eq.s32.totalorder %s15, 0
    %p104 = por %p102, %p103
    %p105 = scmp.ne.s32.totalorder %s93, %s94
    %p106 = scmp.eq.s32.totalorder %s16, 1
    %p107 = por %p105, %p106
    %p109 = scmp.ne.s32.totalorder %s94, %s108
    %p110 = scmp.eq.s32.totalorder %s16, 0
    %p111 = por %p109, %p110
    %s112 = ssub.s32 %s10, %s17
    %p113 = scmp.eq.s32.totalorder %s112, 0
    %s115 = sadd.s32 %s114, 1
    %s116 = scalar_select %p113, %s114, %s115
    %p119 = pneg %p113
    %p120 = scmp.eq.s32.totalorder %s10, 1
    %p121 = por %p119, %p120
    %p122 = scmp.ne.s32.totalorder %s114, %s117
    %p123 = scmp.eq.s32.totalorder %s10, 0
    %p124 = por %p122, %p123
    %p125 = scmp.ne.s32.totalorder %s114, %s117
    %p126 = scmp.eq.s32.totalorder %s15, 1
    %p127 = por %p125, %p126
    %p128 = scmp.ne.s32.totalorder %s117, %s118
    %p129 = scmp.eq.s32.totalorder %s15, 0
    %p130 = por %p128, %p129
    %p131 = scmp.ne.s32.totalorder %s117, %s118
    %p132 = scmp.eq.s32.totalorder %s16, 1
    %p133 = por %p131, %p132
    %p135 = scmp.ne.s32.totalorder %s118, %s134
    %p136 = scmp.eq.s32.totalorder %s16, 0
    %p137 = por %p135, %p136
    %p138 = scmp.le.s32.totalorder 1, %s10
    %p139 = scmp.lt.s32.totalorder %s10, 3
    %p140 = pnand %p138, %p139
    %p141 = pneg %p140
    // Predicated region
    $region9: #{basic_block_forward.5} parent=5 // pred_check
      _
    $region10: #{basic_block_forward.5} parent=5 // pred_check_branch
      %143 = sbr.rel (%p140) target = $region12
    $region11: #{basic_block_forward.5} parent=5 // pred_region
      %s144 = ssub.s32 %s10, 1
      // Predicated region
      $region13: #{basic_block_forward.5} parent=11 // pred_check
        %p145 = pneg %p83
      $region14: #{basic_block_forward.5} parent=11 // pred_check_branch
        %147 = sbr.rel (%p145) target = $region16
      $region15: #{basic_block_forward.5} parent=11 // pred_region
        _
      $region16: #{basic_block_forward.5} parent=11 // pred_fallthru
        _
      // Predicated region
      $region17: #{basic_block_forward.5} parent=11 // pred_check
        %p148 = pneg %p104
      $region18: #{basic_block_forward.5} parent=11 // pred_check_branch
        %150 = sbr.rel (%p148) target = $region20
      $region19: #{basic_block_forward.5} parent=11 // pred_region
        _
      $region20: #{basic_block_forward.5} parent=11 // pred_fallthru
        _
    $region12: #{basic_block_forward.5} parent=5 // pred_fallthru
      _
    %p151 = scmp.lt.s32.totalorder %s10, 2
    // Predicated region
    $region21: #{basic_block_forward.5} parent=5 // pred_check
      %p152 = pneg %p151
    $region22: #{basic_block_forward.5} parent=5 // pred_check_branch
      %154 = sbr.rel (%p152) target = $region24
    $region23: #{basic_block_forward.5} parent=5 // pred_region
      // Predicated region
      $region25: #{basic_block_forward.5} parent=23 // pred_check
        %p155 = pneg %p30
      $region26: #{basic_block_forward.5} parent=23 // pred_check_branch
        %157 = sbr.rel (%p155) target = $region28
      $region27: #{basic_block_forward.5} parent=23 // pred_region
        %p158 = scmp.lt.s32.totalorder %s10, 1
        %s159 = scalar_select %p158, %s10, 1
        %s160 = smul.addr %s159, 2
        %s161 = smul.addr %s160, 8
        %s162 = scalar_lea.vmem %s0, %s161
      $region28: #{basic_block_forward.5} parent=23 // pred_fallthru
        _
      // Predicated region
      $region29: #{basic_block_forward.5} parent=23 // pred_check
        %p163 = pneg %p56
      $region30: #{basic_block_forward.5} parent=23 // pred_check_branch
        %165 = sbr.rel (%p163) target = $region32
      $region31: #{basic_block_forward.5} parent=23 // pred_region
        %p166 = scmp.lt.s32.totalorder %s10, 1
        %s167 = scalar_select %p166, %s10, 1
        %s168 = smul.addr %s167, 2
        %s169 = smul.addr %s168, 8
        %s170 = scalar_lea.vmem %s1, %s169
      $region32: #{basic_block_forward.5} parent=23 // pred_fallthru
        _
    $region24: #{basic_block_forward.5} parent=5 // pred_fallthru
      _
    %p171 = scmp.le.s32.totalorder 1, %s10
    %p172 = scmp.lt.s32.totalorder %s10, 3
    %p173 = pnand %p171, %p172
    %p174 = pneg %p173
    // Predicated region
    $region33: #{basic_block_forward.5} parent=5 // pred_check
      _
    $region34: #{basic_block_forward.5} parent=5 // pred_check_branch
      %176 = sbr.rel (%p173) target = $region36
    $region35: #{basic_block_forward.5} parent=5 // pred_region
      %s177 = ssub.s32 %s10, 1
      %p178 = scmp.lt.s32.totalorder %s15, 1
      %s179 = scalar_select %p178, %s15, 1
      %s180 = smul.addr %s179, 2
      %s181 = smul.addr %s180, 8
      %s182 = scalar_lea.vmem %s0, %s181
      %p183 = pneg %p36
      %p184 = pneg %p33
      %p185 = scmp.lt.s32.totalorder %s15, 1
      %s186 = scalar_select %p185, %s15, 1
      %s187 = smul.addr %s186, 2
      %s188 = smul.addr %s187, 8
      %s189 = scalar_lea.vmem %s1, %s188
      %p190 = pneg %p62
      %p191 = pneg %p59
      %p192 = pneg %p83
      %p193 = pneg %p80
      %p194 = pneg %p104
      %p195 = pneg %p101
      %p196 = pneg %p130
      %p197 = pneg %p127
      %p198 = scmp.lt.s32.totalorder %s15, 1
      %s199 = scalar_select %p198, %s15, 1
      %s200 = smul.addr %s199, 2
      %s201 = smul.addr %s200, 8
      %s202 = scalar_lea.vmem %s4, %s201
      %p203 = scmp.lt.s32.totalorder %s15, 1
      %s204 = scalar_select %p203, %s15, 1
      %s205 = smul.addr %s204, 2
      %s206 = smul.addr %s205, 8
      %s207 = scalar_lea.vmem %s0, %s206
      %p208 = scmp.lt.s32.totalorder %s15, 1
      %s209 = scalar_select %p208, %s15, 1
      %s210 = smul.addr %s209, 2
      %s211 = smul.addr %s210, 8
      %s212 = scalar_lea.vmem %s1, %s211
      %p213 = scmp.lt.s32.totalorder %s15, 1
      %s214 = scalar_select %p213, %s15, 1
      %s215 = smul.addr %s214, 2
      %s216 = smul.addr %s215, 8
      %s217 = scalar_lea.vmem %s4, %s216
      %v218 = vld [vmem:[%s207] sm:$0xff]
      %v219 = vld [vmem:[%s207 + $0x8] sm:$0xff]
      %v220 = vld [vmem:[%s2] sm:$0xff]
      %222 = vset.pattern.permute.xlu0 0
      %223 = vperm.xlu0 %222, %v220
      %v224 = vpop.permute.xlu0 %223
      %v226 = vmul.f32 %v218, %v224
      %v227 = vmul.f32 %v219, %v224
      %v228 = vld [vmem:[%s3] sm:$0xff]
      %230 = vset.pattern.permute.xlu0 0
      %231 = vperm.xlu0 %230, %v228
      %v232 = vpop.permute.xlu0 %231
      %v234 = vadd.f32 %v226, %v232
      %v235 = vadd.f32 %v227, %v232
      %v236 = vld [vmem:[%s212] sm:$0xff]
      %v237 = vld [vmem:[%s212 + $0x8] sm:$0xff]
      %v238 = vadd.f32 %v234, %v236
      %v239 = vadd.f32 %v235, %v237
      %v240 = vmax.f32 %v238, 0.0
      %v241 = vmax.f32 %v239, 0.0
      %242 = vst [vmem:[%s217] sm:$0xff] %v240
      %243 = vst [vmem:[%s217 + $0x8] sm:$0xff] %v241
      %p244 = scmp.lt.s32.totalorder %s15, 1
      %s245 = scalar_select %p244, %s15, 1
      %s246 = smul.addr %s245, 2
      %s247 = smul.addr %s246, 8
      %s248 = scalar_lea.vmem %s4, %s247
      // Predicated region
      $region37: #{basic_block_forward.5} parent=35 // pred_check
        %p249 = pneg %p127
      $region38: #{basic_block_forward.5} parent=35 // pred_check_branch
        %251 = sbr.rel (%p249) target = $region40
      $region39: #{basic_block_forward.5} parent=35 // pred_region
        _
      $region40: #{basic_block_forward.5} parent=35 // pred_fallthru
        _
    $region36: #{basic_block_forward.5} parent=5 // pred_fallthru
      _
    %p252 = scmp.le.s32.totalorder 2, %s10
    // Predicated region
    $region41: #{basic_block_forward.5} parent=5 // pred_check
      %p253 = pneg %p252
    $region42: #{basic_block_forward.5} parent=5 // pred_check_branch
      %255 = sbr.rel (%p253) target = $region44
    $region43: #{basic_block_forward.5} parent=5 // pred_region
      %s256 = ssub.s32 %s10, 2
      // Predicated region
      $region45: #{basic_block_forward.5} parent=43 // pred_check
        %p257 = pneg %p133
      $region46: #{basic_block_forward.5} parent=43 // pred_check_branch
        %259 = sbr.rel (%p257) target = $region48
      $region47: #{basic_block_forward.5} parent=43 // pred_region
        %p260 = scmp.lt.s32.totalorder %s16, 1
        %s261 = scalar_select %p260, %s16, 1
        %s262 = smul.addr %s261, 2
        %s263 = smul.addr %s262, 8
        %s264 = scalar_lea.vmem %s4, %s263
      $region48: #{basic_block_forward.5} parent=43 // pred_fallthru
        _
    $region44: #{basic_block_forward.5} parent=5 // pred_fallthru
      _
  $region6: #{basic_block_forward.5} parent=0 // loop_footer
    %s14 = sadd.s32 1, %s10
  $region7: #{basic_block_forward.5} parent=0 // loop_footer_branch
    %9 = sbr.rel target = $region3
  $region8: #{basic_block_forward.5} parent=0 // loop_exit
    _

// kernel: basic_block_forward.3
$region0: #{basic_block_forward.3}
  #allocation0 [shape = 'u32[]', space=smem, size = 0x4, offset = 0x4, fixed_abs, tag = 'smem constant byte address 0x4 - core index']
  #allocation1 [shape = 'u32[144,128]{1,0:T(1,128)}', space=vmem, size = 0x12000, scoped, tag = 'internal scratch']
  #allocation2 [shape = 'f32[8,401]{1,0:T(8,128)}', space=vmem, size = 0x4000, scoped, tag = 'scratch operand']
  #allocation3 [shape = 'f32[72,256]{1,0:T(8,128)}', space=vmem, size = 0x12000, scoped, tag = 'scratch operand']
  %s0 = inlined_call_operand.vmem [shape: f32[2,8,256], index: 0, kind: input, shape index: {}]
  %s1 = inlined_call_operand.vmem [shape: f32[8,72], index: 1, kind: input, shape index: {}]
  %s2 = inlined_call_operand.vmem [shape: f32[2,256], index: 2, kind: input, shape index: {}]
  %s3 = inlined_call_operand.vmem [shape: f32[2,8,256], index: 3, kind: output, shape index: {0}]
  %s4 = inlined_call_operand.vmem [shape: f32[2,8,2], index: 4, kind: output, shape index: {1}]
  %5 = xla_tuple %s3, %s4
  %s6 = sld [smem:[#allocation0]]
  $region53: #{basic_block_forward.3} parent=0
    _
  %s8 = ssub.s32 1, %s6
  %s9 = scalar_select 0, %s8, %s6
  loop: start=0, step=1, limit=4
  $region2: #{basic_block_forward.3} parent=0 // loop_pre_header
    _
  $region3: #{basic_block_forward.3} parent=0 // loop_header
    %s11 = sphi 0, %s15
    %p12 = scmp.ge.s32.totalorder %s11, 4
    %s21 = sphi 0, %s23
    %s24 = sphi 0, %s21
    %s25 = sphi 0, %s24
    %s41 = sphi 0, %s25
    %s45 = sphi 0, %s45
    %s47 = sphi 0, %s45
    %s48 = sphi 0, %s47
    %s62 = sphi 0, %s48
    %s66 = sphi 0, %s66
    %s68 = sphi 0, %s66
    %s69 = sphi 0, %s68
    %s83 = sphi 0, %s69
    %s89 = sphi 0, %s91
    %s92 = sphi 0, %s89
    %s93 = sphi 0, %s92
    %s109 = sphi 0, %s93
    %s115 = sphi 0, %s117
    %s118 = sphi 0, %s115
    %s119 = sphi 0, %s118
    %s135 = sphi 0, %s119
  $region4: #{basic_block_forward.3} parent=0 // loop_header_branch
    %14 = sbr.rel (%p12) target = $region8
  $region5: #{basic_block_forward.3} parent=0 // loop_body
    %s16 = ssub.s32 %s11, 1
    %s17 = ssub.s32 %s11, 2
    %s18 = sadd.s32 %s11, 1
    %s19 = ssub.s32 %s11, %s18
    %p20 = scmp.eq.s32.totalorder %s19, 0
    %s22 = sadd.s32 %s21, 1
    %s23 = scalar_select %p20, %s21, %s22
    %p26 = pneg %p20
    %p27 = scmp.eq.s32.totalorder %s11, 1
    %p28 = por %p26, %p27
    %p29 = scmp.ne.s32.totalorder %s21, %s24
    %p30 = scmp.eq.s32.totalorder %s11, 0
    %p31 = por %p29, %p30
    %p32 = scmp.ne.s32.totalorder %s21, %s24
    %p33 = scmp.eq.s32.totalorder %s16, 1
    %p34 = por %p32, %p33
    %p35 = scmp.ne.s32.totalorder %s24, %s25
    %p36 = scmp.eq.s32.totalorder %s16, 0
    %p37 = por %p35, %p36
    %p38 = scmp.ne.s32.totalorder %s24, %s25
    %p39 = scmp.eq.s32.totalorder %s17, 1
    %p40 = por %p38, %p39
    %p42 = scmp.ne.s32.totalorder %s25, %s41
    %p43 = scmp.eq.s32.totalorder %s17, 0
    %p44 = por %p42, %p43
    %s46 = sadd.s32 %s45, 1
    %p49 = scmp.eq.s32.totalorder %s11, 1
    %p50 = scmp.ne.s32.totalorder %s45, %s47
    %p51 = scmp.eq.s32.totalorder %s11, 0
    %p52 = por %p50, %p51
    %p53 = scmp.ne.s32.totalorder %s45, %s47
    %p54 = scmp.eq.s32.totalorder %s16, 1
    %p55 = por %p53, %p54
    %p56 = scmp.ne.s32.totalorder %s47, %s48
    %p57 = scmp.eq.s32.totalorder %s16, 0
    %p58 = por %p56, %p57
    %p59 = scmp.ne.s32.totalorder %s47, %s48
    %p60 = scmp.eq.s32.totalorder %s17, 1
    %p61 = por %p59, %p60
    %p63 = scmp.ne.s32.totalorder %s48, %s62
    %p64 = scmp.eq.s32.totalorder %s17, 0
    %p65 = por %p63, %p64
    %s67 = sadd.s32 %s66, 1
    %p70 = scmp.eq.s32.totalorder %s11, 1
    %p71 = scmp.ne.s32.totalorder %s66, %s68
    %p72 = scmp.eq.s32.totalorder %s11, 0
    %p73 = por %p71, %p72
    %p74 = scmp.ne.s32.totalorder %s66, %s68
    %p75 = scmp.eq.s32.totalorder %s16, 1
    %p76 = por %p74, %p75
    %p77 = scmp.ne.s32.totalorder %s68, %s69
    %p78 = scmp.eq.s32.totalorder %s16, 0
    %p79 = por %p77, %p78
    %p80 = scmp.ne.s32.totalorder %s68, %s69
    %p81 = scmp.eq.s32.totalorder %s17, 1
    %p82 = por %p80, %p81
    %p84 = scmp.ne.s32.totalorder %s69, %s83
    %p85 = scmp.eq.s32.totalorder %s17, 0
    %p86 = por %p84, %p85
    %s87 = ssub.s32 %s11, %s18
    %p88 = scmp.eq.s32.totalorder %s87, 0
    %s90 = sadd.s32 %s89, 1
    %s91 = scalar_select %p88, %s89, %s90
    %p94 = pneg %p88
    %p95 = scmp.eq.s32.totalorder %s11, 1
    %p96 = por %p94, %p95
    %p97 = scmp.ne.s32.totalorder %s89, %s92
    %p98 = scmp.eq.s32.totalorder %s11, 0
    %p99 = por %p97, %p98
    %p100 = scmp.ne.s32.totalorder %s89, %s92
    %p101 = scmp.eq.s32.totalorder %s16, 1
    %p102 = por %p100, %p101
    %p103 = scmp.ne.s32.totalorder %s92, %s93
    %p104 = scmp.eq.s32.totalorder %s16, 0
    %p105 = por %p103, %p104
    %p106 = scmp.ne.s32.totalorder %s92, %s93
    %p107 = scmp.eq.s32.totalorder %s17, 1
    %p108 = por %p106, %p107
    %p110 = scmp.ne.s32.totalorder %s93, %s109
    %p111 = scmp.eq.s32.totalorder %s17, 0
    %p112 = por %p110, %p111
    %s113 = ssub.s32 %s11, %s18
    %p114 = scmp.eq.s32.totalorder %s113, 0
    %s116 = sadd.s32 %s115, 1
    %s117 = scalar_select %p114, %s115, %s116
    %p120 = pneg %p114
    %p121 = scmp.eq.s32.totalorder %s11, 1
    %p122 = por %p120, %p121
    %p123 = scmp.ne.s32.totalorder %s115, %s118
    %p124 = scmp.eq.s32.totalorder %s11, 0
    %p125 = por %p123, %p124
    %p126 = scmp.ne.s32.totalorder %s115, %s118
    %p127 = scmp.eq.s32.totalorder %s16, 1
    %p128 = por %p126, %p127
    %p129 = scmp.ne.s32.totalorder %s118, %s119
    %p130 = scmp.eq.s32.totalorder %s16, 0
    %p131 = por %p129, %p130
    %p132 = scmp.ne.s32.totalorder %s118, %s119
    %p133 = scmp.eq.s32.totalorder %s17, 1
    %p134 = por %p132, %p133
    %p136 = scmp.ne.s32.totalorder %s119, %s135
    %p137 = scmp.eq.s32.totalorder %s17, 0
    %p138 = por %p136, %p137
    %p139 = scmp.le.s32.totalorder 1, %s11
    %p140 = scmp.lt.s32.totalorder %s11, 3
    %p141 = pnand %p139, %p140
    %p142 = pneg %p141
    // Predicated region
    $region9: #{basic_block_forward.3} parent=5 // pred_check
      _
    $region10: #{basic_block_forward.3} parent=5 // pred_check_branch
      %144 = sbr.rel (%p141) target = $region12
    $region11: #{basic_block_forward.3} parent=5 // pred_region
      %s145 = ssub.s32 %s11, 1
      // Predicated region
      $region13: #{basic_block_forward.3} parent=11 // pred_check
        %p146 = pneg %p58
      $region14: #{basic_block_forward.3} parent=11 // pred_check_branch
        %148 = sbr.rel (%p146) target = $region16
      $region15: #{basic_block_forward.3} parent=11 // pred_region
        _
      $region16: #{basic_block_forward.3} parent=11 // pred_fallthru
        _
      // Predicated region
      $region17: #{basic_block_forward.3} parent=11 // pred_check
        %p149 = pneg %p79
      $region18: #{basic_block_forward.3} parent=11 // pred_check_branch
        %151 = sbr.rel (%p149) target = $region20
      $region19: #{basic_block_forward.3} parent=11 // pred_region
        _
      $region20: #{basic_block_forward.3} parent=11 // pred_fallthru
        _
    $region12: #{basic_block_forward.3} parent=5 // pred_fallthru
      _
    %p152 = scmp.lt.s32.totalorder %s11, 2
    // Predicated region
    $region21: #{basic_block_forward.3} parent=5 // pred_check
      %p153 = pneg %p152
    $region22: #{basic_block_forward.3} parent=5 // pred_check_branch
      %155 = sbr.rel (%p153) target = $region24
    $region23: #{basic_block_forward.3} parent=5 // pred_region
      // Predicated region
      $region25: #{basic_block_forward.3} parent=23 // pred_check
        %p156 = pneg %p31
      $region26: #{basic_block_forward.3} parent=23 // pred_check_branch
        %158 = sbr.rel (%p156) target = $region28
      $region27: #{basic_block_forward.3} parent=23 // pred_region
        %p159 = scmp.lt.s32.totalorder %s11, 1
        %s160 = scalar_select %p159, %s11, 1
        %s161 = smul.addr %s160, 2
        %s162 = smul.addr %s161, 8
        %s163 = scalar_lea.vmem %s0, %s162
      $region28: #{basic_block_forward.3} parent=23 // pred_fallthru
        _
    $region24: #{basic_block_forward.3} parent=5 // pred_fallthru
      _
    %p164 = scmp.le.s32.totalorder 1, %s11
    %p165 = scmp.lt.s32.totalorder %s11, 3
    %p166 = pnand %p164, %p165
    %p167 = pneg %p166
    // Predicated region
    $region29: #{basic_block_forward.3} parent=5 // pred_check
      _
    $region30: #{basic_block_forward.3} parent=5 // pred_check_branch
      %169 = sbr.rel (%p166) target = $region32
    $region31: #{basic_block_forward.3} parent=5 // pred_region
      %s170 = ssub.s32 %s11, 1
      %p171 = scmp.lt.s32.totalorder %s16, 1
      %s172 = scalar_select %p171, %s16, 1
      %s173 = smul.addr %s172, 2
      %s174 = smul.addr %s173, 8
      %s175 = scalar_lea.vmem %s0, %s174
      %p176 = pneg %p37
      %p177 = pneg %p34
      %p178 = pneg %p58
      %p179 = pneg %p55
      %p180 = pneg %p79
      %p181 = pneg %p76
      %p182 = pneg %p105
      %p183 = pneg %p102
      %p184 = scmp.lt.s32.totalorder %s16, 1
      %s185 = scalar_select %p184, %s16, 1
      %s186 = smul.addr %s185, 2
      %s187 = smul.addr %s186, 8
      %s188 = scalar_lea.vmem %s3, %s187
      %p189 = pneg %p131
      %p190 = pneg %p128
      %p191 = scmp.lt.s32.totalorder %s16, 1
      %s192 = scalar_select %p191, %s16, 1
      %s193 = smul.addr %s192, 8
      %s194 = scalar_lea.vmem %s4, %s193
      %p195 = scmp.lt.s32.totalorder %s16, 1
      %s196 = scalar_select %p195, %s16, 1
      %s197 = smul.addr %s196, 2
      %s198 = smul.addr %s197, 8
      %s199 = scalar_lea.vmem %s0, %s198
      %p200 = scmp.lt.s32.totalorder %s16, 1
      %s201 = scalar_select %p200, %s16, 1
      %s202 = smul.addr %s201, 2
      %s203 = smul.addr %s202, 8
      %s204 = scalar_lea.vmem %s3, %s203
      %p205 = scmp.lt.s32.totalorder %s16, 1
      %s206 = scalar_select %p205, %s16, 1
      %s207 = smul.addr %s206, 8
      %s208 = scalar_lea.vmem %s4, %s207
      %v209 = vld [vmem:[%s199] sm:$0xff]
      %v210 = vld [vmem:[%s199 + $0x8] sm:$0xff]
      %211 = vst [vmem:[#allocation2] sm:$0xff] 0.0
      %vm212 = vcmask 138240
      %213 = vst.msk [vmem:[#allocation2 + $0x18] sm:$0xff] %vm212, 0.0
      %214 = vst [vmem:[#allocation2 + $0x8] sm:$0xff] %v209
      %215 = vst [vmem:[#allocation2 + $0x10] sm:$0xff] %v210
      %v216 = vld [vmem:[%s2] ss:$2 sm:$0x3]
      %s217 = scalar_lea.vmem %s2, 1
      %v218 = vld [vmem:[%s217] ss:$2 sm:$0x3]
      %v219 = vld [vmem:[#allocation2] sm:$0xff]
      %v220 = vld [vmem:[#allocation2 + $0x8] sm:$0xff]
      %v221 = vld [vmem:[#allocation2 + $0x10] sm:$0xff]
      %v223 = vlaneseq
      %v224 = vshrl.u32 %v223, 7
      %v225 = vsub.s32 0, %v224
      %v226 = vrot.slane %v216, %v225
      %v227 = vlaneseq
      %v228 = vshrl.u32 %v227, 7
      %v229 = vsub.s32 1, %v228
      %v230 = vrot.slane %v216, %v229
      %231 = vrot.lane.b32.xlu0 %v226, 111
      %v232 = vpop.permute.xlu0 %231
      %233 = vrot.lane.b32.xlu0 %v230, 111
      %v234 = vpop.permute.xlu0 %233
      %vm235 = vcmask 908288
      %v236 = vsel %vm235, %v232, %v234
      %v240 = vmul.f32 %v219, %v232
      %v241 = vmul.f32 %v220, %v236
      %v242 = vmul.f32 %v221, %v234
      %246 = vrot.lane.b32.xlu0 %v240, 17
      %v247 = vpop.permute.xlu0 %246
      %248 = vrot.lane.b32.xlu0 %v241, 17
      %v249 = vpop.permute.xlu0 %248
      %250 = vrot.lane.b32.xlu0 %v242, 17
      %v251 = vpop.permute.xlu0 %250
      %v252 = vsel %vm212, %v247, %v249
      %v253 = vsel %vm212, %v249, %v251
      %256 = vst [vmem:[#allocation3] sm:$0xff] %v252
      %257 = vst [vmem:[#allocation3 + $0x8] sm:$0xff] %v253
      %v258 = vld [vmem:[#allocation2] sm:$0xff]
      %v259 = vld [vmem:[#allocation2 + $0x8] sm:$0xff]
      %v260 = vld [vmem:[#allocation2 + $0x10] sm:$0xff]
      %264 = vrot.lane.b32.xlu0 %v258, 16
      %v265 = vpop.permute.xlu0 %264
      %266 = vrot.lane.b32.xlu0 %v259, 16
      %v267 = vpop.permute.xlu0 %266
      %268 = vrot.lane.b32.xlu0 %v260, 16
      %v269 = vpop.permute.xlu0 %268
      %vm270 = vcmask 130048
      %v271 = vsel %vm270, %v265, %v267
      %v272 = vsel %vm270, %v267, %v269
      %275 = vst [vmem:[#allocation3 + $0x10] sm:$0xff] %v271
      %276 = vst [vmem:[#allocation3 + $0x18] sm:$0xff] %v272
      %v277 = vld [vmem:[#allocation2] sm:$0xff]
      %v278 = vld [vmem:[#allocation2 + $0x8] sm:$0xff]
      %v279 = vld [vmem:[#allocation2 + $0x10] sm:$0xff]
      %v281 = vlaneseq
      %v282 = vshrl.u32 %v281, 7
      %v283 = vsub.s32 0, %v282
      %v284 = vrot.slane %v218, %v283
      %v285 = vlaneseq
      %v286 = vshrl.u32 %v285, 7
      %v287 = vsub.s32 1, %v286
      %v288 = vrot.slane %v218, %v287
      %289 = vrot.lane.b32.xlu0 %v284, 113
      %v290 = vpop.permute.xlu0 %289
      %291 = vrot.lane.b32.xlu0 %v288, 113
      %v292 = vpop.permute.xlu0 %291
      %vm293 = vcmask 924672
      %v294 = vsel %vm293, %v290, %v292
      %v298 = vmul.f32 %v277, %v290
      %v299 = vmul.f32 %v278, %v294
      %v300 = vmul.f32 %v279, %v292
      %304 = vrot.lane.b32.xlu0 %v298, 15
      %v305 = vpop.permute.xlu0 %304
      %306 = vrot.lane.b32.xlu0 %v299, 15
      %v307 = vpop.permute.xlu0 %306
      %308 = vrot.lane.b32.xlu0 %v300, 15
      %v309 = vpop.permute.xlu0 %308
      %vm310 = vcmask 121856
      %v311 = vsel %vm310, %v305, %v307
      %v312 = vsel %vm310, %v307, %v309
      %315 = vst [vmem:[#allocation3 + $0x20] sm:$0xff] %v311
      %316 = vst [vmem:[#allocation3 + $0x28] sm:$0xff] %v312
      %v317 = vld [vmem:[#allocation2] sm:$0xff]
      %v318 = vld [vmem:[#allocation2 + $0x8] sm:$0xff]
      %v319 = vld [vmem:[#allocation2 + $0x10] sm:$0xff]
      %320 = vrot.lane.b32.xlu0 %v226, 127
      %v321 = vpop.permute.xlu0 %320
      %322 = vrot.lane.b32.xlu0 %v230, 127
      %v323 = vpop.permute.xlu0 %322
      %vm324 = vcmask 1039360
      %v325 = vsel %vm324, %v321, %v323
      %v329 = vmul.f32 %v317, %v321
      %v330 = vmul.f32 %v318, %v325
      %v331 = vmul.f32 %v319, %v323
      %335 = vrot.lane.b32.xlu0 %v329, 1
      %v336 = vpop.permute.xlu0 %335
      %337 = vrot.lane.b32.xlu0 %v330, 1
      %v338 = vpop.permute.xlu0 %337
      %339 = vrot.lane.b32.xlu0 %v331, 1
      %v340 = vpop.permute.xlu0 %339
      %vm341 = vcmask 7168
      %v342 = vsel %vm341, %v336, %v338
      %v343 = vsel %vm341, %v338, %v340
      %346 = vst [vmem:[#allocation3 + $0x30] sm:$0xff] %v342
      %347 = vst [vmem:[#allocation3 + $0x38] sm:$0xff] %v343
      %v348 = vld [vmem:[#allocation2 + $0x8] sm:$0xff]
      %v349 = vld [vmem:[#allocation2 + $0x10] sm:$0xff]
      %350 = vst [vmem:[#allocation3 + $0x40] sm:$0xff] %v348
      %351 = vst [vmem:[#allocation3 + $0x48] sm:$0xff] %v349
      %v352 = vld [vmem:[#allocation2 + $0x8] sm:$0xff]
      %v353 = vld [vmem:[#allocation2 + $0x10] sm:$0xff]
      %v354 = vld [vmem:[#allocation2 + $0x18] sm:$0xff]
      %355 = vrot.lane.b32.xlu0 %v284, 1
      %v356 = vpop.permute.xlu0 %355
      %357 = vrot.lane.b32.xlu0 %v288, 1
      %v358 = vpop.permute.xlu0 %357
      %v359 = vsel %vm341, %v356, %v358
      %v363 = vmul.f32 %v352, %v356
      %v364 = vmul.f32 %v353, %v359
      %v365 = vmul.f32 %v354, %v358
      %369 = vrot.lane.b32.xlu0 %v363, 127
      %v370 = vpop.permute.xlu0 %369
      %371 = vrot.lane.b32.xlu0 %v364, 127
      %v372 = vpop.permute.xlu0 %371
      %373 = vrot.lane.b32.xlu0 %v365, 127
      %v374 = vpop.permute.xlu0 %373
      %v375 = vsel %vm324, %v370, %v372
      %v376 = vsel %vm324, %v372, %v374
      %379 = vst [vmem:[#allocation3 + $0x50] sm:$0xff] %v375
      %380 = vst [vmem:[#allocation3 + $0x58] sm:$0xff] %v376
      %v381 = vld [vmem:[#allocation2 + $0x8] sm:$0xff]
      %v382 = vld [vmem:[#allocation2 + $0x10] sm:$0xff]
      %v383 = vld [vmem:[#allocation2 + $0x18] sm:$0xff]
      %384 = vrot.lane.b32.xlu0 %v226, 15
      %v385 = vpop.permute.xlu0 %384
      %386 = vrot.lane.b32.xlu0 %v230, 15
      %v387 = vpop.permute.xlu0 %386
      %v388 = vsel %vm310, %v385, %v387
      %v392 = vmul.f32 %v381, %v385
      %v393 = vmul.f32 %v382, %v388
      %v394 = vmul.f32 %v383, %v387
      %398 = vrot.lane.b32.xlu0 %v392, 113
      %v399 = vpop.permute.xlu0 %398
      %400 = vrot.lane.b32.xlu0 %v393, 113
      %v401 = vpop.permute.xlu0 %400
      %402 = vrot.lane.b32.xlu0 %v394, 113
      %v403 = vpop.permute.xlu0 %402
      %v404 = vsel %vm293, %v399, %v401
      %v405 = vsel %vm293, %v401, %v403
      %408 = vst [vmem:[#allocation3 + $0x60] sm:$0xff] %v404
      %409 = vst [vmem:[#allocation3 + $0x68] sm:$0xff] %v405
      %v410 = vld [vmem:[#allocation2 + $0x8] sm:$0xff]
      %v411 = vld [vmem:[#allocation2 + $0x10] sm:$0xff]
      %v412 = vld [vmem:[#allocation2 + $0x18] sm:$0xff]
      %416 = vrot.lane.b32.xlu0 %v410, 112
      %v417 = vpop.permute.xlu0 %416
      %418 = vrot.lane.b32.xlu0 %v411, 112
      %v419 = vpop.permute.xlu0 %418
      %420 = vrot.lane.b32.xlu0 %v412, 112
      %v421 = vpop.permute.xlu0 %420
      %vm422 = vcmask 916480
      %v423 = vsel %vm422, %v417, %v419
      %v424 = vsel %vm422, %v419, %v421
      %427 = vst [vmem:[#allocation3 + $0x70] sm:$0xff] %v423
      %428 = vst [vmem:[#allocation3 + $0x78] sm:$0xff] %v424
      %v429 = vld [vmem:[#allocation2 + $0x8] sm:$0xff]
      %v430 = vld [vmem:[#allocation2 + $0x10] sm:$0xff]
      %v431 = vld [vmem:[#allocation2 + $0x18] sm:$0xff]
      %432 = vrot.lane.b32.xlu0 %v284, 17
      %v433 = vpop.permute.xlu0 %432
      %434 = vrot.lane.b32.xlu0 %v288, 17
      %v435 = vpop.permute.xlu0 %434
      %v436 = vsel %vm212, %v433, %v435
      %v440 = vmul.f32 %v429, %v433
      %v441 = vmul.f32 %v430, %v436
      %v442 = vmul.f32 %v431, %v435
      %446 = vrot.lane.b32.xlu0 %v440, 111
      %v447 = vpop.permute.xlu0 %446
      %448 = vrot.lane.b32.xlu0 %v441, 111
      %v449 = vpop.permute.xlu0 %448
      %450 = vrot.lane.b32.xlu0 %v442, 111
      %v451 = vpop.permute.xlu0 %450
      %v452 = vsel %vm235, %v447, %v449
      %v453 = vsel %vm235, %v449, %v451
      %456 = vst [vmem:[#allocation3 + $0x80] sm:$0xff] %v452
      %457 = vst [vmem:[#allocation3 + $0x88] sm:$0xff] %v453
      %v458 = vld [vmem:[%s1] sm:$0xff]
      %v459 = vld [vmem:[#allocation3] sm:$0xff]
      %v460 = vld [vmem:[#allocation3 + $0x8] sm:$0xff]
      %v461 = vld [vmem:[#allocation3 + $0x10] sm:$0xff]
      %v462 = vld [vmem:[#allocation3 + $0x18] sm:$0xff]
      %v463 = vld [vmem:[#allocation3 + $0x20] sm:$0xff]
      %v464 = vld [vmem:[#allocation3 + $0x28] sm:$0xff]
      %v465 = vld [vmem:[#allocation3 + $0x30] sm:$0xff]
      %v466 = vld [vmem:[#allocation3 + $0x38] sm:$0xff]
      %v467 = vld [vmem:[#allocation3 + $0x40] sm:$0xff]
      %v468 = vld [vmem:[#allocation3 + $0x48] sm:$0xff]
      %v469 = vld [vmem:[#allocation3 + $0x50] sm:$0xff]
      %v470 = vld [vmem:[#allocation3 + $0x58] sm:$0xff]
      %v471 = vld [vmem:[#allocation3 + $0x60] sm:$0xff]
      %v472 = vld [vmem:[#allocation3 + $0x68] sm:$0xff]
      %v473 = vld [vmem:[#allocation3 + $0x70] sm:$0xff]
      %v474 = vld [vmem:[#allocation3 + $0x78] sm:$0xff]
      %v475 = vld [vmem:[#allocation3 + $0x80] sm:$0xff]
      %v476 = vld [vmem:[#allocation3 + $0x88] sm:$0xff]
      %vm477 = vcmask 588800
      %v479 = vsel %vm477, %v458, 0
      %481 = vmatprep.subr.mxu0 %v460
      %482 = vmatpush1.msra.mxu0 %v459
      %483 = vmatprep.subr.mxu0 %v462
      %484 = vmatpush1.msra.mxu0 %v461
      %485 = vmatprep.subr.mxu0 %v464
      %486 = vmatpush1.msra.mxu0 %v463
      %487 = vmatprep.subr.mxu0 %v466
      %488 = vmatpush1.msra.mxu0 %v465
      %489 = vmatprep.subr.mxu0 %v468
      %490 = vmatpush1.msra.mxu0 %v467
      %491 = vmatprep.subr.mxu0 %v470
      %492 = vmatpush1.msra.mxu0 %v469
      %493 = vmatprep.subr.mxu0 %v472
      %494 = vmatpush1.msra.mxu0 %v471
      %495 = vmatprep.subr.mxu0 %v474
      %496 = vmatpush1.msra.mxu0 %v473
      %497 = vmatprep.subr.mxu0 %v476
      %498 = vmatpush1.msra.mxu0 %v475
      %499 = vmatprep.subr.mxu0 0.0
      %500 = vmatpush1.msra.mxu0 0.0
      %501 = vmatprep.subr.mxu0 0.0
      %502 = vmatpush1.msra.mxu0 0.0
      %503 = vmatprep.subr.mxu0 0.0
      %504 = vmatpush1.msra.mxu0 0.0
      %505 = vmatprep.subr.mxu0 0.0
      %506 = vmatpush1.msra.mxu0 0.0
      %507 = vmatprep.subr.mxu0 0.0
      %508 = vmatpush1.msra.mxu0 0.0
      %509 = vmatprep.subr.mxu0 0.0
      %510 = vmatpush1.msra.mxu0 0.0
      %511 = vmatprep.subr.mxu0 0.0
      %512 = vmatpush1.msra.mxu0 0.0
      %513 = vmatprep.subr.mxu0 0.0
      %514 = vmatpush1.msra.mxu0 0.0
      %515 = vmatprep.subr.mxu0 0.0
      %516 = vmatpush1.msra.mxu0 0.0
      %517 = vmatprep.subr.mxu0 0.0
      %518 = vmatpush1.msra.mxu0 0.0
      %519 = vmatprep.subr.mxu0 0.0
      %520 = vmatpush1.msra.mxu0 0.0
      %521 = vmatprep.subr.mxu0 0.0
      %522 = vmatpush1.msra.mxu0 0.0
      %523 = vmatprep.subr.mxu0 0.0
      %524 = vmatpush1.msra.mxu0 0.0
      %525 = vmatprep.subr.mxu0 0.0
      %526 = vmatpush1.msra.mxu0 0.0
      %527 = vmatprep.subr.mxu0 0.0
      %528 = vmatpush1.msra.mxu0 0.0
      %529 = vmatprep.subr.mxu0 0.0
      %530 = vmatpush1.msra.mxu0 0.0
      %531 = vmatprep.subr.mxu0 0.0
      %532 = vmatpush1.msra.mxu0 0.0
      %533 = vmatprep.subr.mxu0 0.0
      %534 = vmatpush1.msra.mxu0 0.0
      %535 = vmatprep.subr.mxu0 0.0
      %536 = vmatpush1.msra.mxu0 0.0
      %537 = vmatprep.subr.mxu0 0.0
      %538 = vmatpush1.msra.mxu0 0.0
      %539 = vmatprep.subr.mxu0 0.0
      %540 = vmatpush1.msra.mxu0 0.0
      %541 = vmatprep.subr.mxu0 0.0
      %542 = vmatpush1.msra.mxu0 0.0
      %543 = vmatprep.subr.mxu0 0.0
      %544 = vmatpush1.msra.mxu0 0.0
      %545 = vmatprep.mubr.f32.mxu0 0.0
      %546 = vmatmul.mubr.f32.gmra.mrb[0].mxu0 %v479
      %v547 = vpop.f32.mrb[0].mxu0
      %v548 = vadd.f32 0.0, %v547
      %v549 = vpop.f32.mrb[0].mxu0
      %v550 = vadd.f32 0.0, %v549
      %551 = vdwg.mxu0
      %552 = vst [vmem:[%s204] sm:$0xff] %v548
      %553 = vst [vmem:[%s204 + $0x8] sm:$0xff] %v550
      %v554 = vadd.f32 %v548, %v550
      %555 = vadd.xlane.f32.xlu0 %v554
      %v556 = vpop.xlane.xlu0 %555
      %557 = vst.msk [vmem:[%s208] sm:$0xff] %vm341, %v556
      %v558 = vmul.f32 %v548, %v548
      %v559 = vmul.f32 %v550, %v550
      %v560 = vadd.f32 %v558, %v559
      %561 = vadd.xlane.f32.xlu0 %v560
      %v562 = vpop.xlane.xlu0 %561
      %vm563 = vcmask 15368
      %564 = vst.msk [vmem:[%s208] sm:$0xff] %vm563, %v562
      %p565 = scmp.lt.s32.totalorder %s16, 1
      %s566 = scalar_select %p565, %s16, 1
      %s567 = smul.addr %s566, 2
      %s568 = smul.addr %s567, 8
      %s569 = scalar_lea.vmem %s3, %s568
      %p570 = scmp.lt.s32.totalorder %s16, 1
      %s571 = scalar_select %p570, %s16, 1
      %s572 = smul.addr %s571, 8
      %s573 = scalar_lea.vmem %s4, %s572
      // Predicated region
      $region33: #{basic_block_forward.3} parent=31 // pred_check
        %p574 = pneg %p102
      $region34: #{basic_block_forward.3} parent=31 // pred_check_branch
        %576 = sbr.rel (%p574) target = $region36
      $region35: #{basic_block_forward.3} parent=31 // pred_region
        _
      $region36: #{basic_block_forward.3} parent=31 // pred_fallthru
        _
      // Predicated region
      $region37: #{basic_block_forward.3} parent=31 // pred_check
        %p577 = pneg %p128
      $region38: #{basic_block_forward.3} parent=31 // pred_check_branch
        %579 = sbr.rel (%p577) target = $region40
      $region39: #{basic_block_forward.3} parent=31 // pred_region
        _
      $region40: #{basic_block_forward.3} parent=31 // pred_fallthru
        _
    $region32: #{basic_block_forward.3} parent=5 // pred_fallthru
      _
    %p580 = scmp.le.s32.totalorder 2, %s11
    // Predicated region
    $region41: #{basic_block_forward.3} parent=5 // pred_check
      %p581 = pneg %p580
    $region42: #{basic_block_forward.3} parent=5 // pred_check_branch
      %583 = sbr.rel (%p581) target = $region44
    $region43: #{basic_block_forward.3} parent=5 // pred_region
      %s584 = ssub.s32 %s11, 2
      // Predicated region
      $region45: #{basic_block_forward.3} parent=43 // pred_check
        %p585 = pneg %p108
      $region46: #{basic_block_forward.3} parent=43 // pred_check_branch
        %587 = sbr.rel (%p585) target = $region48
      $region47: #{basic_block_forward.3} parent=43 // pred_region
        %p588 = scmp.lt.s32.totalorder %s17, 1
        %s589 = scalar_select %p588, %s17, 1
        %s590 = smul.addr %s589, 2
        %s591 = smul.addr %s590, 8
        %s592 = scalar_lea.vmem %s3, %s591
      $region48: #{basic_block_forward.3} parent=43 // pred_fallthru
        _
      // Predicated region
      $region49: #{basic_block_forward.3} parent=43 // pred_check
        %p593 = pneg %p134
      $region50: #{basic_block_forward.3} parent=43 // pred_check_branch
        %595 = sbr.rel (%p593) target = $region52
      $region51: #{basic_block_forward.3} parent=43 // pred_region
        %p596 = scmp.lt.s32.totalorder %s17, 1
        %s597 = scalar_select %p596, %s17, 1
        %s598 = smul.addr %s597, 8
        %s599 = scalar_lea.vmem %s4, %s598
      $region52: #{basic_block_forward.3} parent=43 // pred_fallthru
        _
    $region44: #{basic_block_forward.3} parent=5 // pred_fallthru
      _
  $region6: #{basic_block_forward.3} parent=0 // loop_footer
    %s15 = sadd.s32 1, %s11
  $region7: #{basic_block_forward.3} parent=0 // loop_footer_branch
    %10 = sbr.rel target = $region3
  $region8: #{basic_block_forward.3} parent=0 // loop_exit
    _

// kernel: basic_block_forward.4
$region0: #{basic_block_forward.4}
  #allocation0 [shape = 'u32[]', space=smem, size = 0x4, offset = 0x4, fixed_abs, tag = 'smem constant byte address 0x4 - core index']
  #allocation1 [shape = 'u32[144,128]{1,0:T(1,128)}', space=vmem, size = 0x12000, scoped, tag = 'internal scratch']
  #allocation2 [shape = 'f32[8,401]{1,0:T(8,128)}', space=vmem, size = 0x4000, scoped, tag = 'scratch operand']
  #allocation3 [shape = 'f32[72,256]{1,0:T(8,128)}', space=vmem, size = 0x12000, scoped, tag = 'scratch operand']
  %s0 = inlined_call_operand.vmem [shape: f32[2,8,256], index: 0, kind: input, shape index: {}]
  %s1 = inlined_call_operand.vmem [shape: f32[8,72], index: 1, kind: input, shape index: {}]
  %s2 = inlined_call_operand.vmem [shape: f32[2,256], index: 2, kind: input, shape index: {}]
  %s3 = inlined_call_operand.vmem [shape: f32[8,1], index: 3, kind: input, shape index: {}]
  %s4 = inlined_call_operand.vmem [shape: f32[8,1], index: 4, kind: input, shape index: {}]
  %s5 = inlined_call_operand.vmem [shape: f32[2,8,256], index: 5, kind: output, shape index: {0}]
  %s6 = inlined_call_operand.vmem [shape: f32[2,8,2], index: 6, kind: output, shape index: {1}]
  %7 = xla_tuple %s5, %s6
  %s8 = sld [smem:[#allocation0]]
  $region61: #{basic_block_forward.4} parent=0
    _
  %s10 = ssub.s32 1, %s8
  %s11 = scalar_select 0, %s10, %s8
  loop: start=0, step=1, limit=4
  $region2: #{basic_block_forward.4} parent=0 // loop_pre_header
    _
  $region3: #{basic_block_forward.4} parent=0 // loop_header
    %s13 = sphi 0, %s17
    %p14 = scmp.ge.s32.totalorder %s13, 4
    %s23 = sphi 0, %s25
    %s26 = sphi 0, %s23
    %s27 = sphi 0, %s26
    %s43 = sphi 0, %s27
    %s47 = sphi 0, %s47
    %s49 = sphi 0, %s47
    %s50 = sphi 0, %s49
    %s64 = sphi 0, %s50
    %s68 = sphi 0, %s68
    %s70 = sphi 0, %s68
    %s71 = sphi 0, %s70
    %s85 = sphi 0, %s71
    %s89 = sphi 0, %s89
    %s91 = sphi 0, %s89
    %s92 = sphi 0, %s91
    %s106 = sphi 0, %s92
    %s110 = sphi 0, %s110
    %s112 = sphi 0, %s110
    %s113 = sphi 0, %s112
    %s127 = sphi 0, %s113
    %s133 = sphi 0, %s135
    %s136 = sphi 0, %s133
    %s137 = sphi 0, %s136
    %s153 = sphi 0, %s137
    %s159 = sphi 0, %s161
    %s162 = sphi 0, %s159
    %s163 = sphi 0, %s162
    %s179 = sphi 0, %s163
  $region4: #{basic_block_forward.4} parent=0 // loop_header_branch
    %16 = sbr.rel (%p14) target = $region8
  $region5: #{basic_block_forward.4} parent=0 // loop_body
    %s18 = ssub.s32 %s13, 1
    %s19 = ssub.s32 %s13, 2
    %s20 = sadd.s32 %s13, 1
    %s21 = ssub.s32 %s13, %s20
    %p22 = scmp.eq.s32.totalorder %s21, 0
    %s24 = sadd.s32 %s23, 1
    %s25 = scalar_select %p22, %s23, %s24
    %p28 = pneg %p22
    %p29 = scmp.eq.s32.totalorder %s13, 1
    %p30 = por %p28, %p29
    %p31 = scmp.ne.s32.totalorder %s23, %s26
    %p32 = scmp.eq.s32.totalorder %s13, 0
    %p33 = por %p31, %p32
    %p34 = scmp.ne.s32.totalorder %s23, %s26
    %p35 = scmp.eq.s32.totalorder %s18, 1
    %p36 = por %p34, %p35
    %p37 = scmp.ne.s32.totalorder %s26, %s27
    %p38 = scmp.eq.s32.totalorder %s18, 0
    %p39 = por %p37, %p38
    %p40 = scmp.ne.s32.totalorder %s26, %s27
    %p41 = scmp.eq.s32.totalorder %s19, 1
    %p42 = por %p40, %p41
    %p44 = scmp.ne.s32.totalorder %s27, %s43
    %p45 = scmp.eq.s32.totalorder %s19, 0
    %p46 = por %p44, %p45
    %s48 = sadd.s32 %s47, 1
    %p51 = scmp.eq.s32.totalorder %s13, 1
    %p52 = scmp.ne.s32.totalorder %s47, %s49
    %p53 = scmp.eq.s32.totalorder %s13, 0
    %p54 = por %p52, %p53
    %p55 = scmp.ne.s32.totalorder %s47, %s49
    %p56 = scmp.eq.s32.totalorder %s18, 1
    %p57 = por %p55, %p56
    %p58 = scmp.ne.s32.totalorder %s49, %s50
    %p59 = scmp.eq.s32.totalorder %s18, 0
    %p60 = por %p58, %p59
    %p61 = scmp.ne.s32.totalorder %s49, %s50
    %p62 = scmp.eq.s32.totalorder %s19, 1
    %p63 = por %p61, %p62
    %p65 = scmp.ne.s32.totalorder %s50, %s64
    %p66 = scmp.eq.s32.totalorder %s19, 0
    %p67 = por %p65, %p66
    %s69 = sadd.s32 %s68, 1
    %p72 = scmp.eq.s32.totalorder %s13, 1
    %p73 = scmp.ne.s32.totalorder %s68, %s70
    %p74 = scmp.eq.s32.totalorder %s13, 0
    %p75 = por %p73, %p74
    %p76 = scmp.ne.s32.totalorder %s68, %s70
    %p77 = scmp.eq.s32.totalorder %s18, 1
    %p78 = por %p76, %p77
    %p79 = scmp.ne.s32.totalorder %s70, %s71
    %p80 = scmp.eq.s32.totalorder %s18, 0
    %p81 = por %p79, %p80
    %p82 = scmp.ne.s32.totalorder %s70, %s71
    %p83 = scmp.eq.s32.totalorder %s19, 1
    %p84 = por %p82, %p83
    %p86 = scmp.ne.s32.totalorder %s71, %s85
    %p87 = scmp.eq.s32.totalorder %s19, 0
    %p88 = por %p86, %p87
    %s90 = sadd.s32 %s89, 1
    %p93 = scmp.eq.s32.totalorder %s13, 1
    %p94 = scmp.ne.s32.totalorder %s89, %s91
    %p95 = scmp.eq.s32.totalorder %s13, 0
    %p96 = por %p94, %p95
    %p97 = scmp.ne.s32.totalorder %s89, %s91
    %p98 = scmp.eq.s32.totalorder %s18, 1
    %p99 = por %p97, %p98
    %p100 = scmp.ne.s32.totalorder %s91, %s92
    %p101 = scmp.eq.s32.totalorder %s18, 0
    %p102 = por %p100, %p101
    %p103 = scmp.ne.s32.totalorder %s91, %s92
    %p104 = scmp.eq.s32.totalorder %s19, 1
    %p105 = por %p103, %p104
    %p107 = scmp.ne.s32.totalorder %s92, %s106
    %p108 = scmp.eq.s32.totalorder %s19, 0
    %p109 = por %p107, %p108
    %s111 = sadd.s32 %s110, 1
    %p114 = scmp.eq.s32.totalorder %s13, 1
    %p115 = scmp.ne.s32.totalorder %s110, %s112
    %p116 = scmp.eq.s32.totalorder %s13, 0
    %p117 = por %p115, %p116
    %p118 = scmp.ne.s32.totalorder %s110, %s112
    %p119 = scmp.eq.s32.totalorder %s18, 1
    %p120 = por %p118, %p119
    %p121 = scmp.ne.s32.totalorder %s112, %s113
    %p122 = scmp.eq.s32.totalorder %s18, 0
    %p123 = por %p121, %p122
    %p124 = scmp.ne.s32.totalorder %s112, %s113
    %p125 = scmp.eq.s32.totalorder %s19, 1
    %p126 = por %p124, %p125
    %p128 = scmp.ne.s32.totalorder %s113, %s127
    %p129 = scmp.eq.s32.totalorder %s19, 0
    %p130 = por %p128, %p129
    %s131 = ssub.s32 %s13, %s20
    %p132 = scmp.eq.s32.totalorder %s131, 0
    %s134 = sadd.s32 %s133, 1
    %s135 = scalar_select %p132, %s133, %s134
    %p138 = pneg %p132
    %p139 = scmp.eq.s32.totalorder %s13, 1
    %p140 = por %p138, %p139
    %p141 = scmp.ne.s32.totalorder %s133, %s136
    %p142 = scmp.eq.s32.totalorder %s13, 0
    %p143 = por %p141, %p142
    %p144 = scmp.ne.s32.totalorder %s133, %s136
    %p145 = scmp.eq.s32.totalorder %s18, 1
    %p146 = por %p144, %p145
    %p147 = scmp.ne.s32.totalorder %s136, %s137
    %p148 = scmp.eq.s32.totalorder %s18, 0
    %p149 = por %p147, %p148
    %p150 = scmp.ne.s32.totalorder %s136, %s137
    %p151 = scmp.eq.s32.totalorder %s19, 1
    %p152 = por %p150, %p151
    %p154 = scmp.ne.s32.totalorder %s137, %s153
    %p155 = scmp.eq.s32.totalorder %s19, 0
    %p156 = por %p154, %p155
    %s157 = ssub.s32 %s13, %s20
    %p158 = scmp.eq.s32.totalorder %s157, 0
    %s160 = sadd.s32 %s159, 1
    %s161 = scalar_select %p158, %s159, %s160
    %p164 = pneg %p158
    %p165 = scmp.eq.s32.totalorder %s13, 1
    %p166 = por %p164, %p165
    %p167 = scmp.ne.s32.totalorder %s159, %s162
    %p168 = scmp.eq.s32.totalorder %s13, 0
    %p169 = por %p167, %p168
    %p170 = scmp.ne.s32.totalorder %s159, %s162
    %p171 = scmp.eq.s32.totalorder %s18, 1
    %p172 = por %p170, %p171
    %p173 = scmp.ne.s32.totalorder %s162, %s163
    %p174 = scmp.eq.s32.totalorder %s18, 0
    %p175 = por %p173, %p174
    %p176 = scmp.ne.s32.totalorder %s162, %s163
    %p177 = scmp.eq.s32.totalorder %s19, 1
    %p178 = por %p176, %p177
    %p180 = scmp.ne.s32.totalorder %s163, %s179
    %p181 = scmp.eq.s32.totalorder %s19, 0
    %p182 = por %p180, %p181
    %p183 = scmp.le.s32.totalorder 1, %s13
    %p184 = scmp.lt.s32.totalorder %s13, 3
    %p185 = pnand %p183, %p184
    %p186 = pneg %p185
    // Predicated region
    $region9: #{basic_block_forward.4} parent=5 // pred_check
      _
    $region10: #{basic_block_forward.4} parent=5 // pred_check_branch
      %188 = sbr.rel (%p185) target = $region12
    $region11: #{basic_block_forward.4} parent=5 // pred_region
      %s189 = ssub.s32 %s13, 1
      // Predicated region
      $region13: #{basic_block_forward.4} parent=11 // pred_check
        %p190 = pneg %p60
      $region14: #{basic_block_forward.4} parent=11 // pred_check_branch
        %192 = sbr.rel (%p190) target = $region16
      $region15: #{basic_block_forward.4} parent=11 // pred_region
        _
      $region16: #{basic_block_forward.4} parent=11 // pred_fallthru
        _
      // Predicated region
      $region17: #{basic_block_forward.4} parent=11 // pred_check
        %p193 = pneg %p81
      $region18: #{basic_block_forward.4} parent=11 // pred_check_branch
        %195 = sbr.rel (%p193) target = $region20
      $region19: #{basic_block_forward.4} parent=11 // pred_region
        _
      $region20: #{basic_block_forward.4} parent=11 // pred_fallthru
        _
      // Predicated region
      $region21: #{basic_block_forward.4} parent=11 // pred_check
        %p196 = pneg %p102
      $region22: #{basic_block_forward.4} parent=11 // pred_check_branch
        %198 = sbr.rel (%p196) target = $region24
      $region23: #{basic_block_forward.4} parent=11 // pred_region
        _
      $region24: #{basic_block_forward.4} parent=11 // pred_fallthru
        _
      // Predicated region
      $region25: #{basic_block_forward.4} parent=11 // pred_check
        %p199 = pneg %p123
      $region26: #{basic_block_forward.4} parent=11 // pred_check_branch
        %201 = sbr.rel (%p199) target = $region28
      $region27: #{basic_block_forward.4} parent=11 // pred_region
        _
      $region28: #{basic_block_forward.4} parent=11 // pred_fallthru
        _
    $region12: #{basic_block_forward.4} parent=5 // pred_fallthru
      _
    %p202 = scmp.lt.s32.totalorder %s13, 2
    // Predicated region
    $region29: #{basic_block_forward.4} parent=5 // pred_check
      %p203 = pneg %p202
    $region30: #{basic_block_forward.4} parent=5 // pred_check_branch
      %205 = sbr.rel (%p203) target = $region32
    $region31: #{basic_block_forward.4} parent=5 // pred_region
      // Predicated region
      $region33: #{basic_block_forward.4} parent=31 // pred_check
        %p206 = pneg %p33
      $region34: #{basic_block_forward.4} parent=31 // pred_check_branch
        %208 = sbr.rel (%p206) target = $region36
      $region35: #{basic_block_forward.4} parent=31 // pred_region
        %p209 = scmp.lt.s32.totalorder %s13, 1
        %s210 = scalar_select %p209, %s13, 1
        %s211 = smul.addr %s210, 2
        %s212 = smul.addr %s211, 8
        %s213 = scalar_lea.vmem %s0, %s212
      $region36: #{basic_block_forward.4} parent=31 // pred_fallthru
        _
    $region32: #{basic_block_forward.4} parent=5 // pred_fallthru
      _
    %p214 = scmp.le.s32.totalorder 1, %s13
    %p215 = scmp.lt.s32.totalorder %s13, 3
    %p216 = pnand %p214, %p215
    %p217 = pneg %p216
    // Predicated region
    $region37: #{basic_block_forward.4} parent=5 // pred_check
      _
    $region38: #{basic_block_forward.4} parent=5 // pred_check_branch
      %219 = sbr.rel (%p216) target = $region40
    $region39: #{basic_block_forward.4} parent=5 // pred_region
      %s220 = ssub.s32 %s13, 1
      %p221 = scmp.lt.s32.totalorder %s18, 1
      %s222 = scalar_select %p221, %s18, 1
      %s223 = smul.addr %s222, 2
      %s224 = smul.addr %s223, 8
      %s225 = scalar_lea.vmem %s0, %s224
      %p226 = pneg %p39
      %p227 = pneg %p36
      %p228 = pneg %p60
      %p229 = pneg %p57
      %p230 = pneg %p81
      %p231 = pneg %p78
      %p232 = pneg %p102
      %p233 = pneg %p99
      %p234 = pneg %p123
      %p235 = pneg %p120
      %p236 = pneg %p149
      %p237 = pneg %p146
      %p238 = scmp.lt.s32.totalorder %s18, 1
      %s239 = scalar_select %p238, %s18, 1
      %s240 = smul.addr %s239, 2
      %s241 = smul.addr %s240, 8
      %s242 = scalar_lea.vmem %s5, %s241
      %p243 = pneg %p175
      %p244 = pneg %p172
      %p245 = scmp.lt.s32.totalorder %s18, 1
      %s246 = scalar_select %p245, %s18, 1
      %s247 = smul.addr %s246, 8
      %s248 = scalar_lea.vmem %s6, %s247
      %p249 = scmp.lt.s32.totalorder %s18, 1
      %s250 = scalar_select %p249, %s18, 1
      %s251 = smul.addr %s250, 2
      %s252 = smul.addr %s251, 8
      %s253 = scalar_lea.vmem %s0, %s252
      %p254 = scmp.lt.s32.totalorder %s18, 1
      %s255 = scalar_select %p254, %s18, 1
      %s256 = smul.addr %s255, 2
      %s257 = smul.addr %s256, 8
      %s258 = scalar_lea.vmem %s5, %s257
      %p259 = scmp.lt.s32.totalorder %s18, 1
      %s260 = scalar_select %p259, %s18, 1
      %s261 = smul.addr %s260, 8
      %s262 = scalar_lea.vmem %s6, %s261
      %v263 = vld [vmem:[%s253] sm:$0xff]
      %v264 = vld [vmem:[%s253 + $0x8] sm:$0xff]
      %v265 = vld [vmem:[%s3] sm:$0xff]
      %267 = vset.pattern.permute.xlu0 0
      %268 = vperm.xlu0 %267, %v265
      %v269 = vpop.permute.xlu0 %268
      %v271 = vmul.f32 %v263, %v269
      %v272 = vmul.f32 %v264, %v269
      %v273 = vld [vmem:[%s4] sm:$0xff]
      %275 = vset.pattern.permute.xlu0 0
      %276 = vperm.xlu0 %275, %v273
      %v277 = vpop.permute.xlu0 %276
      %v279 = vadd.f32 %v271, %v277
      %v280 = vadd.f32 %v272, %v277
      %v281 = vmax.f32 %v279, 0.0
      %v282 = vmax.f32 %v280, 0.0
      %283 = vst [vmem:[#allocation2] sm:$0xff] 0.0
      %vm284 = vcmask 138240
      %285 = vst.msk [vmem:[#allocation2 + $0x18] sm:$0xff] %vm284, 0.0
      %286 = vst [vmem:[#allocation2 + $0x8] sm:$0xff] %v281
      %287 = vst [vmem:[#allocation2 + $0x10] sm:$0xff] %v282
      %v288 = vld [vmem:[%s2] ss:$2 sm:$0x3]
      %s289 = scalar_lea.vmem %s2, 1
      %v290 = vld [vmem:[%s289] ss:$2 sm:$0x3]
      %v291 = vld [vmem:[#allocation2] sm:$0xff]
      %v292 = vld [vmem:[#allocation2 + $0x8] sm:$0xff]
      %v293 = vld [vmem:[#allocation2 + $0x10] sm:$0xff]
      %v295 = vlaneseq
      %v296 = vshrl.u32 %v295, 7
      %v297 = vsub.s32 0, %v296
      %v298 = vrot.slane %v288, %v297
      %v299 = vlaneseq
      %v300 = vshrl.u32 %v299, 7
      %v301 = vsub.s32 1, %v300
      %v302 = vrot.slane %v288, %v301
      %303 = vrot.lane.b32.xlu0 %v298, 111
      %v304 = vpop.permute.xlu0 %303
      %305 = vrot.lane.b32.xlu0 %v302, 111
      %v306 = vpop.permute.xlu0 %305
      %vm307 = vcmask 908288
      %v308 = vsel %vm307, %v304, %v306
      %v312 = vmul.f32 %v291, %v304
      %v313 = vmul.f32 %v292, %v308
      %v314 = vmul.f32 %v293, %v306
      %318 = vrot.lane.b32.xlu0 %v312, 17
      %v319 = vpop.permute.xlu0 %318
      %320 = vrot.lane.b32.xlu0 %v313, 17
      %v321 = vpop.permute.xlu0 %320
      %322 = vrot.lane.b32.xlu0 %v314, 17
      %v323 = vpop.permute.xlu0 %322
      %v324 = vsel %vm284, %v319, %v321
      %v325 = vsel %vm284, %v321, %v323
      %328 = vst [vmem:[#allocation3] sm:$0xff] %v324
      %329 = vst [vmem:[#allocation3 + $0x8] sm:$0xff] %v325
      %v330 = vld [vmem:[#allocation2] sm:$0xff]
      %v331 = vld [vmem:[#allocation2 + $0x8] sm:$0xff]
      %v332 = vld [vmem:[#allocation2 + $0x10] sm:$0xff]
      %336 = vrot.lane.b32.xlu0 %v330, 16
      %v337 = vpop.permute.xlu0 %336
      %338 = vrot.lane.b32.xlu0 %v331, 16
      %v339 = vpop.permute.xlu0 %338
      %340 = vrot.lane.b32.xlu0 %v332, 16
      %v341 = vpop.permute.xlu0 %340
      %vm342 = vcmask 130048
      %v343 = vsel %vm342, %v337, %v339
      %v344 = vsel %vm342, %v339, %v341
      %347 = vst [vmem:[#allocation3 + $0x10] sm:$0xff] %v343
      %348 = vst [vmem:[#allocation3 + $0x18] sm:$0xff] %v344
      %v349 = vld [vmem:[#allocation2] sm:$0xff]
      %v350 = vld [vmem:[#allocation2 + $0x8] sm:$0xff]
      %v351 = vld [vmem:[#allocation2 + $0x10] sm:$0xff]
      %v353 = vlaneseq
      %v354 = vshrl.u32 %v353, 7
      %v355 = vsub.s32 0, %v354
      %v356 = vrot.slane %v290, %v355
      %v357 = vlaneseq
      %v358 = vshrl.u32 %v357, 7
      %v359 = vsub.s32 1, %v358
      %v360 = vrot.slane %v290, %v359
      %361 = vrot.lane.b32.xlu0 %v356, 113
      %v362 = vpop.permute.xlu0 %361
      %363 = vrot.lane.b32.xlu0 %v360, 113
      %v364 = vpop.permute.xlu0 %363
      %vm365 = vcmask 924672
      %v366 = vsel %vm365, %v362, %v364
      %v370 = vmul.f32 %v349, %v362
      %v371 = vmul.f32 %v350, %v366
      %v372 = vmul.f32 %v351, %v364
      %376 = vrot.lane.b32.xlu0 %v370, 15
      %v377 = vpop.permute.xlu0 %376
      %378 = vrot.lane.b32.xlu0 %v371, 15
      %v379 = vpop.permute.xlu0 %378
      %380 = vrot.lane.b32.xlu0 %v372, 15
      %v381 = vpop.permute.xlu0 %380
      %vm382 = vcmask 121856
      %v383 = vsel %vm382, %v377, %v379
      %v384 = vsel %vm382, %v379, %v381
      %387 = vst [vmem:[#allocation3 + $0x20] sm:$0xff] %v383
      %388 = vst [vmem:[#allocation3 + $0x28] sm:$0xff] %v384
      %v389 = vld [vmem:[#allocation2] sm:$0xff]
      %v390 = vld [vmem:[#allocation2 + $0x8] sm:$0xff]
      %v391 = vld [vmem:[#allocation2 + $0x10] sm:$0xff]
      %392 = vrot.lane.b32.xlu0 %v298, 127
      %v393 = vpop.permute.xlu0 %392
      %394 = vrot.lane.b32.xlu0 %v302, 127
      %v395 = vpop.permute.xlu0 %394
      %vm396 = vcmask 1039360
      %v397 = vsel %vm396, %v393, %v395
      %v401 = vmul.f32 %v389, %v393
      %v402 = vmul.f32 %v390, %v397
      %v403 = vmul.f32 %v391, %v395
      %407 = vrot.lane.b32.xlu0 %v401, 1
      %v408 = vpop.permute.xlu0 %407
      %409 = vrot.lane.b32.xlu0 %v402, 1
      %v410 = vpop.permute.xlu0 %409
      %411 = vrot.lane.b32.xlu0 %v403, 1
      %v412 = vpop.permute.xlu0 %411
      %vm413 = vcmask 7168
      %v414 = vsel %vm413, %v408, %v410
      %v415 = vsel %vm413, %v410, %v412
      %418 = vst [vmem:[#allocation3 + $0x30] sm:$0xff] %v414
      %419 = vst [vmem:[#allocation3 + $0x38] sm:$0xff] %v415
      %v420 = vld [vmem:[#allocation2 + $0x8] sm:$0xff]
      %v421 = vld [vmem:[#allocation2 + $0x10] sm:$0xff]
      %422 = vst [vmem:[#allocation3 + $0x40] sm:$0xff] %v420
      %423 = vst [vmem:[#allocation3 + $0x48] sm:$0xff] %v421
      %v424 = vld [vmem:[#allocation2 + $0x8] sm:$0xff]
      %v425 = vld [vmem:[#allocation2 + $0x10] sm:$0xff]
      %v426 = vld [vmem:[#allocation2 + $0x18] sm:$0xff]
      %427 = vrot.lane.b32.xlu0 %v356, 1
      %v428 = vpop.permute.xlu0 %427
      %429 = vrot.lane.b32.xlu0 %v360, 1
      %v430 = vpop.permute.xlu0 %429
      %v431 = vsel %vm413, %v428, %v430
      %v435 = vmul.f32 %v424, %v428
      %v436 = vmul.f32 %v425, %v431
      %v437 = vmul.f32 %v426, %v430
      %441 = vrot.lane.b32.xlu0 %v435, 127
      %v442 = vpop.permute.xlu0 %441
      %443 = vrot.lane.b32.xlu0 %v436, 127
      %v444 = vpop.permute.xlu0 %443
      %445 = vrot.lane.b32.xlu0 %v437, 127
      %v446 = vpop.permute.xlu0 %445
      %v447 = vsel %vm396, %v442, %v444
      %v448 = vsel %vm396, %v444, %v446
      %451 = vst [vmem:[#allocation3 + $0x50] sm:$0xff] %v447
      %452 = vst [vmem:[#allocation3 + $0x58] sm:$0xff] %v448
      %v453 = vld [vmem:[#allocation2 + $0x8] sm:$0xff]
      %v454 = vld [vmem:[#allocation2 + $0x10] sm:$0xff]
      %v455 = vld [vmem:[#allocation2 + $0x18] sm:$0xff]
      %456 = vrot.lane.b32.xlu0 %v298, 15
      %v457 = vpop.permute.xlu0 %456
      %458 = vrot.lane.b32.xlu0 %v302, 15
      %v459 = vpop.permute.xlu0 %458
      %v460 = vsel %vm382, %v457, %v459
      %v464 = vmul.f32 %v453, %v457
      %v465 = vmul.f32 %v454, %v460
      %v466 = vmul.f32 %v455, %v459
      %470 = vrot.lane.b32.xlu0 %v464, 113
      %v471 = vpop.permute.xlu0 %470
      %472 = vrot.lane.b32.xlu0 %v465, 113
      %v473 = vpop.permute.xlu0 %472
      %474 = vrot.lane.b32.xlu0 %v466, 113
      %v475 = vpop.permute.xlu0 %474
      %v476 = vsel %vm365, %v471, %v473
      %v477 = vsel %vm365, %v473, %v475
      %480 = vst [vmem:[#allocation3 + $0x60] sm:$0xff] %v476
      %481 = vst [vmem:[#allocation3 + $0x68] sm:$0xff] %v477
      %v482 = vld [vmem:[#allocation2 + $0x8] sm:$0xff]
      %v483 = vld [vmem:[#allocation2 + $0x10] sm:$0xff]
      %v484 = vld [vmem:[#allocation2 + $0x18] sm:$0xff]
      %488 = vrot.lane.b32.xlu0 %v482, 112
      %v489 = vpop.permute.xlu0 %488
      %490 = vrot.lane.b32.xlu0 %v483, 112
      %v491 = vpop.permute.xlu0 %490
      %492 = vrot.lane.b32.xlu0 %v484, 112
      %v493 = vpop.permute.xlu0 %492
      %vm494 = vcmask 916480
      %v495 = vsel %vm494, %v489, %v491
      %v496 = vsel %vm494, %v491, %v493
      %499 = vst [vmem:[#allocation3 + $0x70] sm:$0xff] %v495
      %500 = vst [vmem:[#allocation3 + $0x78] sm:$0xff] %v496
      %v501 = vld [vmem:[#allocation2 + $0x8] sm:$0xff]
      %v502 = vld [vmem:[#allocation2 + $0x10] sm:$0xff]
      %v503 = vld [vmem:[#allocation2 + $0x18] sm:$0xff]
      %504 = vrot.lane.b32.xlu0 %v356, 17
      %v505 = vpop.permute.xlu0 %504
      %506 = vrot.lane.b32.xlu0 %v360, 17
      %v507 = vpop.permute.xlu0 %506
      %v508 = vsel %vm284, %v505, %v507
      %v512 = vmul.f32 %v501, %v505
      %v513 = vmul.f32 %v502, %v508
      %v514 = vmul.f32 %v503, %v507
      %518 = vrot.lane.b32.xlu0 %v512, 111
      %v519 = vpop.permute.xlu0 %518
      %520 = vrot.lane.b32.xlu0 %v513, 111
      %v521 = vpop.permute.xlu0 %520
      %522 = vrot.lane.b32.xlu0 %v514, 111
      %v523 = vpop.permute.xlu0 %522
      %v524 = vsel %vm307, %v519, %v521
      %v525 = vsel %vm307, %v521, %v523
      %528 = vst [vmem:[#allocation3 + $0x80] sm:$0xff] %v524
      %529 = vst [vmem:[#allocation3 + $0x88] sm:$0xff] %v525
      %v530 = vld [vmem:[%s1] sm:$0xff]
      %v531 = vld [vmem:[#allocation3] sm:$0xff]
      %v532 = vld [vmem:[#allocation3 + $0x8] sm:$0xff]
      %v533 = vld [vmem:[#allocation3 + $0x10] sm:$0xff]
      %v534 = vld [vmem:[#allocation3 + $0x18] sm:$0xff]
      %v535 = vld [vmem:[#allocation3 + $0x20] sm:$0xff]
      %v536 = vld [vmem:[#allocation3 + $0x28] sm:$0xff]
      %v537 = vld [vmem:[#allocation3 + $0x30] sm:$0xff]
      %v538 = vld [vmem:[#allocation3 + $0x38] sm:$0xff]
      %v539 = vld [vmem:[#allocation3 + $0x40] sm:$0xff]
      %v540 = vld [vmem:[#allocation3 + $0x48] sm:$0xff]
      %v541 = vld [vmem:[#allocation3 + $0x50] sm:$0xff]
      %v542 = vld [vmem:[#allocation3 + $0x58] sm:$0xff]
      %v543 = vld [vmem:[#allocation3 + $0x60] sm:$0xff]
      %v544 = vld [vmem:[#allocation3 + $0x68] sm:$0xff]
      %v545 = vld [vmem:[#allocation3 + $0x70] sm:$0xff]
      %v546 = vld [vmem:[#allocation3 + $0x78] sm:$0xff]
      %v547 = vld [vmem:[#allocation3 + $0x80] sm:$0xff]
      %v548 = vld [vmem:[#allocation3 + $0x88] sm:$0xff]
      %vm549 = vcmask 588800
      %v551 = vsel %vm549, %v530, 0
      %553 = vmatprep.subr.mxu0 %v532
      %554 = vmatpush1.msra.mxu0 %v531
      %555 = vmatprep.subr.mxu0 %v534
      %556 = vmatpush1.msra.mxu0 %v533
      %557 = vmatprep.subr.mxu0 %v536
      %558 = vmatpush1.msra.mxu0 %v535
      %559 = vmatprep.subr.mxu0 %v538
      %560 = vmatpush1.msra.mxu0 %v537
      %561 = vmatprep.subr.mxu0 %v540
      %562 = vmatpush1.msra.mxu0 %v539
      %563 = vmatprep.subr.mxu0 %v542
      %564 = vmatpush1.msra.mxu0 %v541
      %565 = vmatprep.subr.mxu0 %v544
      %566 = vmatpush1.msra.mxu0 %v543
      %567 = vmatprep.subr.mxu0 %v546
      %568 = vmatpush1.msra.mxu0 %v545
      %569 = vmatprep.subr.mxu0 %v548
      %570 = vmatpush1.msra.mxu0 %v547
      %571 = vmatprep.subr.mxu0 0.0
      %572 = vmatpush1.msra.mxu0 0.0
      %573 = vmatprep.subr.mxu0 0.0
      %574 = vmatpush1.msra.mxu0 0.0
      %575 = vmatprep.subr.mxu0 0.0
      %576 = vmatpush1.msra.mxu0 0.0
      %577 = vmatprep.subr.mxu0 0.0
      %578 = vmatpush1.msra.mxu0 0.0
      %579 = vmatprep.subr.mxu0 0.0
      %580 = vmatpush1.msra.mxu0 0.0
      %581 = vmatprep.subr.mxu0 0.0
      %582 = vmatpush1.msra.mxu0 0.0
      %583 = vmatprep.subr.mxu0 0.0
      %584 = vmatpush1.msra.mxu0 0.0
      %585 = vmatprep.subr.mxu0 0.0
      %586 = vmatpush1.msra.mxu0 0.0
      %587 = vmatprep.subr.mxu0 0.0
      %588 = vmatpush1.msra.mxu0 0.0
      %589 = vmatprep.subr.mxu0 0.0
      %590 = vmatpush1.msra.mxu0 0.0
      %591 = vmatprep.subr.mxu0 0.0
      %592 = vmatpush1.msra.mxu0 0.0
      %593 = vmatprep.subr.mxu0 0.0
      %594 = vmatpush1.msra.mxu0 0.0
      %595 = vmatprep.subr.mxu0 0.0
      %596 = vmatpush1.msra.mxu0 0.0
      %597 = vmatprep.subr.mxu0 0.0
      %598 = vmatpush1.msra.mxu0 0.0
      %599 = vmatprep.subr.mxu0 0.0
      %600 = vmatpush1.msra.mxu0 0.0
      %601 = vmatprep.subr.mxu0 0.0
      %602 = vmatpush1.msra.mxu0 0.0
      %603 = vmatprep.subr.mxu0 0.0
      %604 = vmatpush1.msra.mxu0 0.0
      %605 = vmatprep.subr.mxu0 0.0
      %606 = vmatpush1.msra.mxu0 0.0
      %607 = vmatprep.subr.mxu0 0.0
      %608 = vmatpush1.msra.mxu0 0.0
      %609 = vmatprep.subr.mxu0 0.0
      %610 = vmatpush1.msra.mxu0 0.0
      %611 = vmatprep.subr.mxu0 0.0
      %612 = vmatpush1.msra.mxu0 0.0
      %613 = vmatprep.subr.mxu0 0.0
      %614 = vmatpush1.msra.mxu0 0.0
      %615 = vmatprep.subr.mxu0 0.0
      %616 = vmatpush1.msra.mxu0 0.0
      %617 = vmatprep.mubr.f32.mxu0 0.0
      %618 = vmatmul.mubr.f32.gmra.mrb[0].mxu0 %v551
      %v619 = vpop.f32.mrb[0].mxu0
      %v620 = vadd.f32 0.0, %v619
      %v621 = vpop.f32.mrb[0].mxu0
      %v622 = vadd.f32 0.0, %v621
      %623 = vdwg.mxu0
      %624 = vst [vmem:[%s258] sm:$0xff] %v620
      %625 = vst [vmem:[%s258 + $0x8] sm:$0xff] %v622
      %v626 = vadd.f32 %v620, %v622
      %627 = vadd.xlane.f32.xlu0 %v626
      %v628 = vpop.xlane.xlu0 %627
      %629 = vst.msk [vmem:[%s262] sm:$0xff] %vm413, %v628
      %v630 = vmul.f32 %v620, %v620
      %v631 = vmul.f32 %v622, %v622
      %v632 = vadd.f32 %v630, %v631
      %633 = vadd.xlane.f32.xlu0 %v632
      %v634 = vpop.xlane.xlu0 %633
      %vm635 = vcmask 15368
      %636 = vst.msk [vmem:[%s262] sm:$0xff] %vm635, %v634
      %p637 = scmp.lt.s32.totalorder %s18, 1
      %s638 = scalar_select %p637, %s18, 1
      %s639 = smul.addr %s638, 2
      %s640 = smul.addr %s639, 8
      %s641 = scalar_lea.vmem %s5, %s640
      %p642 = scmp.lt.s32.totalorder %s18, 1
      %s643 = scalar_select %p642, %s18, 1
      %s644 = smul.addr %s643, 8
      %s645 = scalar_lea.vmem %s6, %s644
      // Predicated region
      $region41: #{basic_block_forward.4} parent=39 // pred_check
        %p646 = pneg %p146
      $region42: #{basic_block_forward.4} parent=39 // pred_check_branch
        %648 = sbr.rel (%p646) target = $region44
      $region43: #{basic_block_forward.4} parent=39 // pred_region
        _
      $region44: #{basic_block_forward.4} parent=39 // pred_fallthru
        _
      // Predicated region
      $region45: #{basic_block_forward.4} parent=39 // pred_check
        %p649 = pneg %p172
      $region46: #{basic_block_forward.4} parent=39 // pred_check_branch
        %651 = sbr.rel (%p649) target = $region48
      $region47: #{basic_block_forward.4} parent=39 // pred_region
        _
      $region48: #{basic_block_forward.4} parent=39 // pred_fallthru
        _
    $region40: #{basic_block_forward.4} parent=5 // pred_fallthru
      _
    %p652 = scmp.le.s32.totalorder 2, %s13
    // Predicated region
    $region49: #{basic_block_forward.4} parent=5 // pred_check
      %p653 = pneg %p652
    $region50: #{basic_block_forward.4} parent=5 // pred_check_branch
      %655 = sbr.rel (%p653) target = $region52
    $region51: #{basic_block_forward.4} parent=5 // pred_region
      %s656 = ssub.s32 %s13, 2
      // Predicated region
      $region53: #{basic_block_forward.4} parent=51 // pred_check
        %p657 = pneg %p152
      $region54: #{basic_block_forward.4} parent=51 // pred_check_branch
        %659 = sbr.rel (%p657) target = $region56
      $region55: #{basic_block_forward.4} parent=51 // pred_region
        %p660 = scmp.lt.s32.totalorder %s19, 1
        %s661 = scalar_select %p660, %s19, 1
        %s662 = smul.addr %s661, 2
        %s663 = smul.addr %s662, 8
        %s664 = scalar_lea.vmem %s5, %s663
      $region56: #{basic_block_forward.4} parent=51 // pred_fallthru
        _
      // Predicated region
      $region57: #{basic_block_forward.4} parent=51 // pred_check
        %p665 = pneg %p178
      $region58: #{basic_block_forward.4} parent=51 // pred_check_branch
        %667 = sbr.rel (%p665) target = $region60
      $region59: #{basic_block_forward.4} parent=51 // pred_region
        %p668 = scmp.lt.s32.totalorder %s19, 1
        %s669 = scalar_select %p668, %s19, 1
        %s670 = smul.addr %s669, 8
        %s671 = scalar_lea.vmem %s6, %s670
      $region60: #{basic_block_forward.4} parent=51 // pred_fallthru
        _
    $region52: #{basic_block_forward.4} parent=5 // pred_fallthru
      _
  $region6: #{basic_block_forward.4} parent=0 // loop_footer
    %s17 = sadd.s32 1, %s13
  $region7: #{basic_block_forward.4} parent=0 // loop_footer_branch
    %12 = sbr.rel target = $region3
  $region8: #{basic_block_forward.4} parent=0 // loop_exit
    _

</llo_original>
